<compile_context>
chip_gen: v6e
topology: v6e:2x2x1
jax: 0.10.0
libtpu: 0.0.40
codegen_flags: <defaults>
</compile_context>

<pallas_src>
import jax
import jax.numpy as jnp
from jax.experimental import pallas as pl
from jax.experimental.pallas import tpu as pltpu


def _make_fm_kernel(tile_b: int, num_fields: int, embed_dim: int, padded_dim: int):
    """Builds the FM kernel closed over static shape parameters."""

    def fm_kernel(idx_ref,    # SMEM (B_pad, F) int32  -- scalar-prefetched indices
                  table_ref,  # HBM  (V, DP)           -- [embedding | linear col | zero pad]
                  bias_ref,   # SMEM (1, 1) f32        -- global bias
                  o_ref,      # VMEM (TB, 1) f32       -- per-tile output block
                  ebuf,       # VMEM (F, TB, DP)       -- gathered rows (scratch)
                  sems):      # DMA semaphores (F, TB)
        base = pl.program_id(0) * tile_b

        # ---- fused embedding gather: one row DMA per (sample, field) ----------
        copies = []
        for b in range(tile_b):
            for f in range(num_fields):
                row = idx_ref[base + b, f]
                cp = pltpu.make_async_copy(
                    table_ref.at[pl.ds(row, 1)],   # (1, DP) row in HBM
                    ebuf.at[f, pl.ds(b, 1)],       # (1, DP) slot in VMEM
                    sems.at[f, b],
                )
                cp.start()
                copies.append(cp)
        for cp in copies:
            cp.wait()

        # ---- FM math: pure VPU elementwise + one lane reduce (no MXU) ---------
        e0 = ebuf[0].astype(jnp.float32)           # (TB, DP)
        s, ss = e0, e0 * e0
        for f in range(1, num_fields):
            ef = ebuf[f].astype(jnp.float32)
            s = s + ef
            ss = ss + ef * ef

        col = jax.lax.broadcasted_iota(jnp.int32, (tile_b, padded_dim), 1)
        # Columns [0, D): embedding -> second-order term.  Column D: linear weights
        # (already summed over fields inside `s`).  Columns > D are zero padding.
        fm_part = jnp.where(col < embed_dim, s * s - ss, 0.0)
        lin_part = jnp.where(col == embed_dim, s, 0.0)
        contrib = 0.5 * fm_part + lin_part          # (TB, DP)

        z = jnp.sum(contrib, axis=-1, keepdims=True) + bias_ref[0, 0]
        o_ref[...] = z.astype(o_ref.dtype)

    return fm_kernel


def fm_forward(interaction_pairs, params, *, tile_b: int = 8):
    """Forward pass of the Factorization Machine.

    interaction_pairs: int array (batch, num_fields)
    returns: float32 array (batch,)  == out.squeeze(1) of the PyTorch module.
    """
    table = params["table"]          # (V, DP): embedding cols + linear col + pad
    bias = params["bias"]            # (1, 1) f32
    embed_dim = params["embed_dim"]
    _, padded_dim = table.shape
    B, F = interaction_pairs.shape

    n_tiles = -(-B // tile_b)
    b_pad = n_tiles * tile_b
    idx = interaction_pairs.astype(jnp.int32)
    if b_pad != B:
        # Pad with index 0 (a valid row) so no OOB DMA; padded outputs are sliced off.
        idx = jnp.concatenate([idx, jnp.zeros((b_pad - B, F), jnp.int32)], axis=0)

    kernel = _make_fm_kernel(tile_b, F, embed_dim, padded_dim)

    bytes_accessed = int(
        b_pad * F * padded_dim * table.dtype.itemsize  # fused row gather (dominant)
        + b_pad * F * 4                                # indices (SMEM prefetch)
        + b_pad * 4 + 4                                # output + bias
    )
    cost = pl.CostEstimate(
        flops=int(b_pad * padded_dim * (3 * F + 6)),
        transcendentals=0,
        bytes_accessed=bytes_accessed,
    )

    out = pl.pallas_call(
        kernel,
        out_shape=jax.ShapeDtypeStruct((b_pad, 1), jnp.float32),
        grid_spec=pltpu.PrefetchScalarGridSpec(
            num_scalar_prefetch=1,                # interaction indices -> SMEM
            grid=(n_tiles,),
            in_specs=[
                pl.BlockSpec(memory_space=pl.ANY),                  # table stays in HBM
                pl.BlockSpec(memory_space=pltpu.MemorySpace.SMEM),  # scalar bias
            ],
            out_specs=pl.BlockSpec((tile_b, 1), lambda i, idx_ref: (i, 0)),
            scratch_shapes=[
                pltpu.VMEM((F, tile_b, padded_dim), table.dtype),   # gathered rows
                pltpu.SemaphoreType.DMA((F, tile_b)),
            ],
        ),
        compiler_params=pltpu.CompilerParams(
            dimension_semantics=("parallel",),    # batch tiles independent (v7x: 2 TCs)
            vmem_limit_bytes=16 * 1024 * 1024,
        ),
        cost_estimate=cost,
    )(idx, table, bias)

    return out[:B, 0]


def init_params(key, field_dims: int, embed_dim: int, table_dtype=jnp.float32):
    """Parameters packed for the fused kernel.

    table[:, :D]   = FM embedding weights (xavier_uniform, as in the PyTorch model)
    table[:,  D]   = FeaturesLinear per-feature weight (nn.Embedding default: N(0,1))
    table[:, D+1:] = zero lane padding so each gathered row is a lane-aligned DMA.
    Use table_dtype=jnp.bfloat16 on v6e/v7x to halve gather bytes.
    """
    k_emb, k_lin = jax.random.split(key, 2)
    limit = (6.0 / (field_dims + embed_dim)) ** 0.5       # xavier_uniform on (V, D)
    emb = jax.random.uniform(k_emb, (field_dims, embed_dim), jnp.float32, -limit, limit)
    lin = jax.random.normal(k_lin, (field_dims,), jnp.float32)

    padded_dim = ((embed_dim + 1 + 127) // 128) * 128
    table = jnp.zeros((field_dims, padded_dim), jnp.float32)
    table = table.at[:, :embed_dim].set(emb)
    table = table.at[:, embed_dim].set(lin)

    return {
        "table": table.astype(table_dtype),
        "bias": jnp.zeros((1, 1), jnp.float32),           # torch.zeros((1,))
        "embed_dim": embed_dim,
    }


def fm_reference(interaction_pairs, params):
    """Pure-JAX reference matching the PyTorch forward exactly."""
    table = params["table"].astype(jnp.float32)
    D = params["embed_dim"]
    emb = table[:, :D][interaction_pairs]        # (B, F, D)
    lin_w = table[:, D][interaction_pairs]       # (B, F)
    square_of_sum = jnp.sum(emb, axis=1) ** 2
    sum_of_square = jnp.sum(emb * emb, axis=1)
    fm = 0.5 * jnp.sum(square_of_sum - sum_of_square, axis=1)
    linear = jnp.sum(lin_w, axis=1) + params["bias"][0, 0]
    return linear + fm


if __name__ == "__main__":
    key = jax.random.PRNGKey(0)
    k_params, k_idx = jax.random.split(key)

    field_dims, embed_dim, num_fields, batch = 96, 16, 2, 10
    params = init_params(k_params, field_dims, embed_dim)
    interaction_pairs = jax.random.randint(
        k_idx, (batch, num_fields), 0, field_dims, dtype=jnp.int32)

    # batch=10 with tile_b=8 -> 2 grid tiles, last one padded (exercises both paths).
    out = fm_forward(interaction_pairs, params, tile_b=8)
    out = jax.block_until_ready(out)

    assert out.shape == (batch,)
    assert bool(jnp.all(jnp.isfinite(out)))
    ref = fm_reference(interaction_pairs, params)
    assert bool(jnp.allclose(out, ref, rtol=1e-5, atol=1e-5)), (out, ref)
    print("KERNEL_OK")
</pallas_src>

<mosaic_0001>
module attributes {stable_mosaic.version = 11 : i64} {
  func.func @fm_kernel(%arg0: i32, %arg1: memref<16x2xi32, #tpu.memory_space<smem>>, %arg2: memref<96x128xf32, #tpu.memory_space<any>>, %arg3: memref<1x1xf32, #tpu.memory_space<smem>>, %arg4: memref<8x1xf32, #tpu.memory_space<vmem>>, %arg5: memref<2x8x128xf32, #tpu.memory_space<vmem>>, %arg6: memref<2x8x!tpu.dma_semaphore, #tpu.memory_space<semaphore_mem>>) attributes {dimension_semantics = [#tpu.dimension_semantics<parallel>], iteration_bounds = array<i64: 2>, scalar_prefetch = 1 : i64, scratch_operands = 2 : i64, tpu.core_type = #tpu.core_type<tc>, window_params = [{}, {transform_indices = @transform_1, window_bounds = array<i64: 1, 1>}, {transform_indices = @transform_2, window_bounds = array<i64: 8, 1>}]} {
    %c8_i32 = arith.constant 8 : i32
    %0 = arith.muli %arg0, %c8_i32 : i32
    %c0_i32 = arith.constant 0 : i32
    %1 = arith.addi %0, %c0_i32 : i32
    %2 = arith.index_cast %1 : i32 to index
    %c0 = arith.constant 0 : index
    %3 = memref.load %arg1[%2, %c0] : memref<16x2xi32, #tpu.memory_space<smem>>
    %c0_i32_0 = arith.constant 0 : i32
    %c0_i32_1 = arith.constant 0 : i32
    %c0_i32_2 = arith.constant 0 : i32
    %c0_i32_3 = arith.constant 0 : i32
    %4 = tpu.memref_slice %arg2[%3, %c0_i32_3] : memref<96x128xf32, #tpu.memory_space<any>> -> memref<1x128xf32, #tpu.memory_space<any>>
    %c0_i32_4 = arith.constant 0 : i32
    %c0_i32_5 = arith.constant 0 : i32
    %5 = tpu.memref_slice %arg5[%c0_i32_0, %c0_i32_4, %c0_i32_5] : memref<2x8x128xf32, #tpu.memory_space<vmem>> -> memref<1x1x128xf32, #tpu.memory_space<vmem>>
    %6 = tpu.memref_squeeze %5 : memref<1x1x128xf32, #tpu.memory_space<vmem>> -> memref<1x128xf32, #tpu.memory_space<vmem>>
    %7 = tpu.memref_slice %arg6[%c0_i32_1, %c0_i32_2] : memref<2x8x!tpu.dma_semaphore, #tpu.memory_space<semaphore_mem>> -> memref<1x1x!tpu.dma_semaphore, #tpu.memory_space<semaphore_mem>>
    %8 = tpu.memref_squeeze %7 : memref<1x1x!tpu.dma_semaphore, #tpu.memory_space<semaphore_mem>> -> memref<!tpu.dma_semaphore, #tpu.memory_space<semaphore_mem>>
    tpu.enqueue_dma source(%4 : memref<1x128xf32, #tpu.memory_space<any>>) target(%6 : memref<1x128xf32, #tpu.memory_space<vmem>>) target_semaphore(%8 : memref<!tpu.dma_semaphore, #tpu.memory_space<semaphore_mem>>)
    %c0_i32_6 = arith.constant 0 : i32
    %9 = arith.addi %0, %c0_i32_6 : i32
    %10 = arith.index_cast %9 : i32 to index
    %c1 = arith.constant 1 : index
    %11 = memref.load %arg1[%10, %c1] : memref<16x2xi32, #tpu.memory_space<smem>>
    %c1_i32 = arith.constant 1 : i32
    %c1_i32_7 = arith.constant 1 : i32
    %c0_i32_8 = arith.constant 0 : i32
    %c0_i32_9 = arith.constant 0 : i32
    %12 = tpu.memref_slice %arg2[%11, %c0_i32_9] : memref<96x128xf32, #tpu.memory_space<any>> -> memref<1x128xf32, #tpu.memory_space<any>>
    %c0_i32_10 = arith.constant 0 : i32
    %c0_i32_11 = arith.constant 0 : i32
    %13 = tpu.memref_slice %arg5[%c1_i32, %c0_i32_10, %c0_i32_11] : memref<2x8x128xf32, #tpu.memory_space<vmem>> -> memref<1x1x128xf32, #tpu.memory_space<vmem>>
    %14 = tpu.memref_squeeze %13 : memref<1x1x128xf32, #tpu.memory_space<vmem>> -> memref<1x128xf32, #tpu.memory_space<vmem>>
    %15 = tpu.memref_slice %arg6[%c1_i32_7, %c0_i32_8] : memref<2x8x!tpu.dma_semaphore, #tpu.memory_space<semaphore_mem>> -> memref<1x1x!tpu.dma_semaphore, #tpu.memory_space<semaphore_mem>>
    %16 = tpu.memref_squeeze %15 : memref<1x1x!tpu.dma_semaphore, #tpu.memory_space<semaphore_mem>> -> memref<!tpu.dma_semaphore, #tpu.memory_space<semaphore_mem>>
    tpu.enqueue_dma source(%12 : memref<1x128xf32, #tpu.memory_space<any>>) target(%14 : memref<1x128xf32, #tpu.memory_space<vmem>>) target_semaphore(%16 : memref<!tpu.dma_semaphore, #tpu.memory_space<semaphore_mem>>)
    %c1_i32_12 = arith.constant 1 : i32
    %17 = arith.addi %0, %c1_i32_12 : i32
    %18 = arith.index_cast %17 : i32 to index
    %c0_13 = arith.constant 0 : index
    %19 = memref.load %arg1[%18, %c0_13] : memref<16x2xi32, #tpu.memory_space<smem>>
    %c0_i32_14 = arith.constant 0 : i32
    %c0_i32_15 = arith.constant 0 : i32
    %c1_i32_16 = arith.constant 1 : i32
    %c0_i32_17 = arith.constant 0 : i32
    %20 = tpu.memref_slice %arg2[%19, %c0_i32_17] : memref<96x128xf32, #tpu.memory_space<any>> -> memref<1x128xf32, #tpu.memory_space<any>>
    %c1_i32_18 = arith.constant 1 : i32
    %c0_i32_19 = arith.constant 0 : i32
    %21 = tpu.memref_slice %arg5[%c0_i32_14, %c1_i32_18, %c0_i32_19] : memref<2x8x128xf32, #tpu.memory_space<vmem>> -> memref<1x1x128xf32, #tpu.memory_space<vmem>>
    %22 = tpu.memref_squeeze %21 : memref<1x1x128xf32, #tpu.memory_space<vmem>> -> memref<1x128xf32, #tpu.memory_space<vmem>>
    %23 = tpu.memref_slice %arg6[%c0_i32_15, %c1_i32_16] : memref<2x8x!tpu.dma_semaphore, #tpu.memory_space<semaphore_mem>> -> memref<1x1x!tpu.dma_semaphore, #tpu.memory_space<semaphore_mem>>
    %24 = tpu.memref_squeeze %23 : memref<1x1x!tpu.dma_semaphore, #tpu.memory_space<semaphore_mem>> -> memref<!tpu.dma_semaphore, #tpu.memory_space<semaphore_mem>>
    tpu.enqueue_dma source(%20 : memref<1x128xf32, #tpu.memory_space<any>>) target(%22 : memref<1x128xf32, #tpu.memory_space<vmem>>) target_semaphore(%24 : memref<!tpu.dma_semaphore, #tpu.memory_space<semaphore_mem>>)
    %c1_i32_20 = arith.constant 1 : i32
    %25 = arith.addi %0, %c1_i32_20 : i32
    %26 = arith.index_cast %25 : i32 to index
    %c1_21 = arith.constant 1 : index
    %27 = memref.load %arg1[%26, %c1_21] : memref<16x2xi32, #tpu.memory_space<smem>>
    %c1_i32_22 = arith.constant 1 : i32
    %c1_i32_23 = arith.constant 1 : i32
    %c1_i32_24 = arith.constant 1 : i32
    %c0_i32_25 = arith.constant 0 : i32
    %28 = tpu.memref_slice %arg2[%27, %c0_i32_25] : memref<96x128xf32, #tpu.memory_space<any>> -> memref<1x128xf32, #tpu.memory_space<any>>
    %c1_i32_26 = arith.constant 1 : i32
    %c0_i32_27 = arith.constant 0 : i32
    %29 = tpu.memref_slice %arg5[%c1_i32_22, %c1_i32_26, %c0_i32_27] : memref<2x8x128xf32, #tpu.memory_space<vmem>> -> memref<1x1x128xf32, #tpu.memory_space<vmem>>
    %30 = tpu.memref_squeeze %29 : memref<1x1x128xf32, #tpu.memory_space<vmem>> -> memref<1x128xf32, #tpu.memory_space<vmem>>
    %31 = tpu.memref_slice %arg6[%c1_i32_23, %c1_i32_24] : memref<2x8x!tpu.dma_semaphore, #tpu.memory_space<semaphore_mem>> -> memref<1x1x!tpu.dma_semaphore, #tpu.memory_space<semaphore_mem>>
    %32 = tpu.memref_squeeze %31 : memref<1x1x!tpu.dma_semaphore, #tpu.memory_space<semaphore_mem>> -> memref<!tpu.dma_semaphore, #tpu.memory_space<semaphore_mem>>
    tpu.enqueue_dma source(%28 : memref<1x128xf32, #tpu.memory_space<any>>) target(%30 : memref<1x128xf32, #tpu.memory_space<vmem>>) target_semaphore(%32 : memref<!tpu.dma_semaphore, #tpu.memory_space<semaphore_mem>>)
    %c2_i32 = arith.constant 2 : i32
    %33 = arith.addi %0, %c2_i32 : i32
    %34 = arith.index_cast %33 : i32 to index
    %c0_28 = arith.constant 0 : index
    %35 = memref.load %arg1[%34, %c0_28] : memref<16x2xi32, #tpu.memory_space<smem>>
    %c0_i32_29 = arith.constant 0 : i32
    %c0_i32_30 = arith.constant 0 : i32
    %c2_i32_31 = arith.constant 2 : i32
    %c0_i32_32 = arith.constant 0 : i32
    %36 = tpu.memref_slice %arg2[%35, %c0_i32_32] : memref<96x128xf32, #tpu.memory_space<any>> -> memref<1x128xf32, #tpu.memory_space<any>>
    %c2_i32_33 = arith.constant 2 : i32
    %c0_i32_34 = arith.constant 0 : i32
    %37 = tpu.memref_slice %arg5[%c0_i32_29, %c2_i32_33, %c0_i32_34] : memref<2x8x128xf32, #tpu.memory_space<vmem>> -> memref<1x1x128xf32, #tpu.memory_space<vmem>>
    %38 = tpu.memref_squeeze %37 : memref<1x1x128xf32, #tpu.memory_space<vmem>> -> memref<1x128xf32, #tpu.memory_space<vmem>>
    %39 = tpu.memref_slice %arg6[%c0_i32_30, %c2_i32_31] : memref<2x8x!tpu.dma_semaphore, #tpu.memory_space<semaphore_mem>> -> memref<1x1x!tpu.dma_semaphore, #tpu.memory_space<semaphore_mem>>
    %40 = tpu.memref_squeeze %39 : memref<1x1x!tpu.dma_semaphore, #tpu.memory_space<semaphore_mem>> -> memref<!tpu.dma_semaphore, #tpu.memory_space<semaphore_mem>>
    tpu.enqueue_dma source(%36 : memref<1x128xf32, #tpu.memory_space<any>>) target(%38 : memref<1x128xf32, #tpu.memory_space<vmem>>) target_semaphore(%40 : memref<!tpu.dma_semaphore, #tpu.memory_space<semaphore_mem>>)
    %c2_i32_35 = arith.constant 2 : i32
    %41 = arith.addi %0, %c2_i32_35 : i32
    %42 = arith.index_cast %41 : i32 to index
    %c1_36 = arith.constant 1 : index
    %43 = memref.load %arg1[%42, %c1_36] : memref<16x2xi32, #tpu.memory_space<smem>>
    %c1_i32_37 = arith.constant 1 : i32
    %c1_i32_38 = arith.constant 1 : i32
    %c2_i32_39 = arith.constant 2 : i32
    %c0_i32_40 = arith.constant 0 : i32
    %44 = tpu.memref_slice %arg2[%43, %c0_i32_40] : memref<96x128xf32, #tpu.memory_space<any>> -> memref<1x128xf32, #tpu.memory_space<any>>
    %c2_i32_41 = arith.constant 2 : i32
    %c0_i32_42 = arith.constant 0 : i32
    %45 = tpu.memref_slice %arg5[%c1_i32_37, %c2_i32_41, %c0_i32_42] : memref<2x8x128xf32, #tpu.memory_space<vmem>> -> memref<1x1x128xf32, #tpu.memory_space<vmem>>
    %46 = tpu.memref_squeeze %45 : memref<1x1x128xf32, #tpu.memory_space<vmem>> -> memref<1x128xf32, #tpu.memory_space<vmem>>
    %47 = tpu.memref_slice %arg6[%c1_i32_38, %c2_i32_39] : memref<2x8x!tpu.dma_semaphore, #tpu.memory_space<semaphore_mem>> -> memref<1x1x!tpu.dma_semaphore, #tpu.memory_space<semaphore_mem>>
    %48 = tpu.memref_squeeze %47 : memref<1x1x!tpu.dma_semaphore, #tpu.memory_space<semaphore_mem>> -> memref<!tpu.dma_semaphore, #tpu.memory_space<semaphore_mem>>
    tpu.enqueue_dma source(%44 : memref<1x128xf32, #tpu.memory_space<any>>) target(%46 : memref<1x128xf32, #tpu.memory_space<vmem>>) target_semaphore(%48 : memref<!tpu.dma_semaphore, #tpu.memory_space<semaphore_mem>>)
    %c3_i32 = arith.constant 3 : i32
    %49 = arith.addi %0, %c3_i32 : i32
    %50 = arith.index_cast %49 : i32 to index
    %c0_43 = arith.constant 0 : index
    %51 = memref.load %arg1[%50, %c0_43] : memref<16x2xi32, #tpu.memory_space<smem>>
    %c0_i32_44 = arith.constant 0 : i32
    %c0_i32_45 = arith.constant 0 : i32
    %c3_i32_46 = arith.constant 3 : i32
    %c0_i32_47 = arith.constant 0 : i32
    %52 = tpu.memref_slice %arg2[%51, %c0_i32_47] : memref<96x128xf32, #tpu.memory_space<any>> -> memref<1x128xf32, #tpu.memory_space<any>>
    %c3_i32_48 = arith.constant 3 : i32
    %c0_i32_49 = arith.constant 0 : i32
    %53 = tpu.memref_slice %arg5[%c0_i32_44, %c3_i32_48, %c0_i32_49] : memref<2x8x128xf32, #tpu.memory_space<vmem>> -> memref<1x1x128xf32, #tpu.memory_space<vmem>>
    %54 = tpu.memref_squeeze %53 : memref<1x1x128xf32, #tpu.memory_space<vmem>> -> memref<1x128xf32, #tpu.memory_space<vmem>>
    %55 = tpu.memref_slice %arg6[%c0_i32_45, %c3_i32_46] : memref<2x8x!tpu.dma_semaphore, #tpu.memory_space<semaphore_mem>> -> memref<1x1x!tpu.dma_semaphore, #tpu.memory_space<semaphore_mem>>
    %56 = tpu.memref_squeeze %55 : memref<1x1x!tpu.dma_semaphore, #tpu.memory_space<semaphore_mem>> -> memref<!tpu.dma_semaphore, #tpu.memory_space<semaphore_mem>>
    tpu.enqueue_dma source(%52 : memref<1x128xf32, #tpu.memory_space<any>>) target(%54 : memref<1x128xf32, #tpu.memory_space<vmem>>) target_semaphore(%56 : memref<!tpu.dma_semaphore, #tpu.memory_space<semaphore_mem>>)
    %c3_i32_50 = arith.constant 3 : i32
    %57 = arith.addi %0, %c3_i32_50 : i32
    %58 = arith.index_cast %57 : i32 to index
    %c1_51 = arith.constant 1 : index
    %59 = memref.load %arg1[%58, %c1_51] : memref<16x2xi32, #tpu.memory_space<smem>>
    %c1_i32_52 = arith.constant 1 : i32
    %c1_i32_53 = arith.constant 1 : i32
    %c3_i32_54 = arith.constant 3 : i32
    %c0_i32_55 = arith.constant 0 : i32
    %60 = tpu.memref_slice %arg2[%59, %c0_i32_55] : memref<96x128xf32, #tpu.memory_space<any>> -> memref<1x128xf32, #tpu.memory_space<any>>
    %c3_i32_56 = arith.constant 3 : i32
    %c0_i32_57 = arith.constant 0 : i32
    %61 = tpu.memref_slice %arg5[%c1_i32_52, %c3_i32_56, %c0_i32_57] : memref<2x8x128xf32, #tpu.memory_space<vmem>> -> memref<1x1x128xf32, #tpu.memory_space<vmem>>
    %62 = tpu.memref_squeeze %61 : memref<1x1x128xf32, #tpu.memory_space<vmem>> -> memref<1x128xf32, #tpu.memory_space<vmem>>
    %63 = tpu.memref_slice %arg6[%c1_i32_53, %c3_i32_54] : memref<2x8x!tpu.dma_semaphore, #tpu.memory_space<semaphore_mem>> -> memref<1x1x!tpu.dma_semaphore, #tpu.memory_space<semaphore_mem>>
    %64 = tpu.memref_squeeze %63 : memref<1x1x!tpu.dma_semaphore, #tpu.memory_space<semaphore_mem>> -> memref<!tpu.dma_semaphore, #tpu.memory_space<semaphore_mem>>
    tpu.enqueue_dma source(%60 : memref<1x128xf32, #tpu.memory_space<any>>) target(%62 : memref<1x128xf32, #tpu.memory_space<vmem>>) target_semaphore(%64 : memref<!tpu.dma_semaphore, #tpu.memory_space<semaphore_mem>>)
    %c4_i32 = arith.constant 4 : i32
    %65 = arith.addi %0, %c4_i32 : i32
    %66 = arith.index_cast %65 : i32 to index
    %c0_58 = arith.constant 0 : index
    %67 = memref.load %arg1[%66, %c0_58] : memref<16x2xi32, #tpu.memory_space<smem>>
    %c0_i32_59 = arith.constant 0 : i32
    %c0_i32_60 = arith.constant 0 : i32
    %c4_i32_61 = arith.constant 4 : i32
    %c0_i32_62 = arith.constant 0 : i32
    %68 = tpu.memref_slice %arg2[%67, %c0_i32_62] : memref<96x128xf32, #tpu.memory_space<any>> -> memref<1x128xf32, #tpu.memory_space<any>>
    %c4_i32_63 = arith.constant 4 : i32
    %c0_i32_64 = arith.constant 0 : i32
    %69 = tpu.memref_slice %arg5[%c0_i32_59, %c4_i32_63, %c0_i32_64] : memref<2x8x128xf32, #tpu.memory_space<vmem>> -> memref<1x1x128xf32, #tpu.memory_space<vmem>>
    %70 = tpu.memref_squeeze %69 : memref<1x1x128xf32, #tpu.memory_space<vmem>> -> memref<1x128xf32, #tpu.memory_space<vmem>>
    %71 = tpu.memref_slice %arg6[%c0_i32_60, %c4_i32_61] : memref<2x8x!tpu.dma_semaphore, #tpu.memory_space<semaphore_mem>> -> memref<1x1x!tpu.dma_semaphore, #tpu.memory_space<semaphore_mem>>
    %72 = tpu.memref_squeeze %71 : memref<1x1x!tpu.dma_semaphore, #tpu.memory_space<semaphore_mem>> -> memref<!tpu.dma_semaphore, #tpu.memory_space<semaphore_mem>>
    tpu.enqueue_dma source(%68 : memref<1x128xf32, #tpu.memory_space<any>>) target(%70 : memref<1x128xf32, #tpu.memory_space<vmem>>) target_semaphore(%72 : memref<!tpu.dma_semaphore, #tpu.memory_space<semaphore_mem>>)
    %c4_i32_65 = arith.constant 4 : i32
    %73 = arith.addi %0, %c4_i32_65 : i32
    %74 = arith.index_cast %73 : i32 to index
    %c1_66 = arith.constant 1 : index
    %75 = memref.load %arg1[%74, %c1_66] : memref<16x2xi32, #tpu.memory_space<smem>>
    %c1_i32_67 = arith.constant 1 : i32
    %c1_i32_68 = arith.constant 1 : i32
    %c4_i32_69 = arith.constant 4 : i32
    %c0_i32_70 = arith.constant 0 : i32
    %76 = tpu.memref_slice %arg2[%75, %c0_i32_70] : memref<96x128xf32, #tpu.memory_space<any>> -> memref<1x128xf32, #tpu.memory_space<any>>
    %c4_i32_71 = arith.constant 4 : i32
    %c0_i32_72 = arith.constant 0 : i32
    %77 = tpu.memref_slice %arg5[%c1_i32_67, %c4_i32_71, %c0_i32_72] : memref<2x8x128xf32, #tpu.memory_space<vmem>> -> memref<1x1x128xf32, #tpu.memory_space<vmem>>
    %78 = tpu.memref_squeeze %77 : memref<1x1x128xf32, #tpu.memory_space<vmem>> -> memref<1x128xf32, #tpu.memory_space<vmem>>
    %79 = tpu.memref_slice %arg6[%c1_i32_68, %c4_i32_69] : memref<2x8x!tpu.dma_semaphore, #tpu.memory_space<semaphore_mem>> -> memref<1x1x!tpu.dma_semaphore, #tpu.memory_space<semaphore_mem>>
    %80 = tpu.memref_squeeze %79 : memref<1x1x!tpu.dma_semaphore, #tpu.memory_space<semaphore_mem>> -> memref<!tpu.dma_semaphore, #tpu.memory_space<semaphore_mem>>
    tpu.enqueue_dma source(%76 : memref<1x128xf32, #tpu.memory_space<any>>) target(%78 : memref<1x128xf32, #tpu.memory_space<vmem>>) target_semaphore(%80 : memref<!tpu.dma_semaphore, #tpu.memory_space<semaphore_mem>>)
    %c5_i32 = arith.constant 5 : i32
    %81 = arith.addi %0, %c5_i32 : i32
    %82 = arith.index_cast %81 : i32 to index
    %c0_73 = arith.constant 0 : index
    %83 = memref.load %arg1[%82, %c0_73] : memref<16x2xi32, #tpu.memory_space<smem>>
    %c0_i32_74 = arith.constant 0 : i32
    %c0_i32_75 = arith.constant 0 : i32
    %c5_i32_76 = arith.constant 5 : i32
    %c0_i32_77 = arith.constant 0 : i32
    %84 = tpu.memref_slice %arg2[%83, %c0_i32_77] : memref<96x128xf32, #tpu.memory_space<any>> -> memref<1x128xf32, #tpu.memory_space<any>>
    %c5_i32_78 = arith.constant 5 : i32
    %c0_i32_79 = arith.constant 0 : i32
    %85 = tpu.memref_slice %arg5[%c0_i32_74, %c5_i32_78, %c0_i32_79] : memref<2x8x128xf32, #tpu.memory_space<vmem>> -> memref<1x1x128xf32, #tpu.memory_space<vmem>>
    %86 = tpu.memref_squeeze %85 : memref<1x1x128xf32, #tpu.memory_space<vmem>> -> memref<1x128xf32, #tpu.memory_space<vmem>>
    %87 = tpu.memref_slice %arg6[%c0_i32_75, %c5_i32_76] : memref<2x8x!tpu.dma_semaphore, #tpu.memory_space<semaphore_mem>> -> memref<1x1x!tpu.dma_semaphore, #tpu.memory_space<semaphore_mem>>
    %88 = tpu.memref_squeeze %87 : memref<1x1x!tpu.dma_semaphore, #tpu.memory_space<semaphore_mem>> -> memref<!tpu.dma_semaphore, #tpu.memory_space<semaphore_mem>>
    tpu.enqueue_dma source(%84 : memref<1x128xf32, #tpu.memory_space<any>>) target(%86 : memref<1x128xf32, #tpu.memory_space<vmem>>) target_semaphore(%88 : memref<!tpu.dma_semaphore, #tpu.memory_space<semaphore_mem>>)
    %c5_i32_80 = arith.constant 5 : i32
    %89 = arith.addi %0, %c5_i32_80 : i32
    %90 = arith.index_cast %89 : i32 to index
    %c1_81 = arith.constant 1 : index
    %91 = memref.load %arg1[%90, %c1_81] : memref<16x2xi32, #tpu.memory_space<smem>>
    %c1_i32_82 = arith.constant 1 : i32
    %c1_i32_83 = arith.constant 1 : i32
    %c5_i32_84 = arith.constant 5 : i32
    %c0_i32_85 = arith.constant 0 : i32
    %92 = tpu.memref_slice %arg2[%91, %c0_i32_85] : memref<96x128xf32, #tpu.memory_space<any>> -> memref<1x128xf32, #tpu.memory_space<any>>
    %c5_i32_86 = arith.constant 5 : i32
    %c0_i32_87 = arith.constant 0 : i32
    %93 = tpu.memref_slice %arg5[%c1_i32_82, %c5_i32_86, %c0_i32_87] : memref<2x8x128xf32, #tpu.memory_space<vmem>> -> memref<1x1x128xf32, #tpu.memory_space<vmem>>
    %94 = tpu.memref_squeeze %93 : memref<1x1x128xf32, #tpu.memory_space<vmem>> -> memref<1x128xf32, #tpu.memory_space<vmem>>
    %95 = tpu.memref_slice %arg6[%c1_i32_83, %c5_i32_84] : memref<2x8x!tpu.dma_semaphore, #tpu.memory_space<semaphore_mem>> -> memref<1x1x!tpu.dma_semaphore, #tpu.memory_space<semaphore_mem>>
    %96 = tpu.memref_squeeze %95 : memref<1x1x!tpu.dma_semaphore, #tpu.memory_space<semaphore_mem>> -> memref<!tpu.dma_semaphore, #tpu.memory_space<semaphore_mem>>
    tpu.enqueue_dma source(%92 : memref<1x128xf32, #tpu.memory_space<any>>) target(%94 : memref<1x128xf32, #tpu.memory_space<vmem>>) target_semaphore(%96 : memref<!tpu.dma_semaphore, #tpu.memory_space<semaphore_mem>>)
    %c6_i32 = arith.constant 6 : i32
    %97 = arith.addi %0, %c6_i32 : i32
    %98 = arith.index_cast %97 : i32 to index
    %c0_88 = arith.constant 0 : index
    %99 = memref.load %arg1[%98, %c0_88] : memref<16x2xi32, #tpu.memory_space<smem>>
    %c0_i32_89 = arith.constant 0 : i32
    %c0_i32_90 = arith.constant 0 : i32
    %c6_i32_91 = arith.constant 6 : i32
    %c0_i32_92 = arith.constant 0 : i32
    %100 = tpu.memref_slice %arg2[%99, %c0_i32_92] : memref<96x128xf32, #tpu.memory_space<any>> -> memref<1x128xf32, #tpu.memory_space<any>>
    %c6_i32_93 = arith.constant 6 : i32
    %c0_i32_94 = arith.constant 0 : i32
    %101 = tpu.memref_slice %arg5[%c0_i32_89, %c6_i32_93, %c0_i32_94] : memref<2x8x128xf32, #tpu.memory_space<vmem>> -> memref<1x1x128xf32, #tpu.memory_space<vmem>>
    %102 = tpu.memref_squeeze %101 : memref<1x1x128xf32, #tpu.memory_space<vmem>> -> memref<1x128xf32, #tpu.memory_space<vmem>>
    %103 = tpu.memref_slice %arg6[%c0_i32_90, %c6_i32_91] : memref<2x8x!tpu.dma_semaphore, #tpu.memory_space<semaphore_mem>> -> memref<1x1x!tpu.dma_semaphore, #tpu.memory_space<semaphore_mem>>
    %104 = tpu.memref_squeeze %103 : memref<1x1x!tpu.dma_semaphore, #tpu.memory_space<semaphore_mem>> -> memref<!tpu.dma_semaphore, #tpu.memory_space<semaphore_mem>>
    tpu.enqueue_dma source(%100 : memref<1x128xf32, #tpu.memory_space<any>>) target(%102 : memref<1x128xf32, #tpu.memory_space<vmem>>) target_semaphore(%104 : memref<!tpu.dma_semaphore, #tpu.memory_space<semaphore_mem>>)
    %c6_i32_95 = arith.constant 6 : i32
    %105 = arith.addi %0, %c6_i32_95 : i32
    %106 = arith.index_cast %105 : i32 to index
    %c1_96 = arith.constant 1 : index
    %107 = memref.load %arg1[%106, %c1_96] : memref<16x2xi32, #tpu.memory_space<smem>>
    %c1_i32_97 = arith.constant 1 : i32
    %c1_i32_98 = arith.constant 1 : i32
    %c6_i32_99 = arith.constant 6 : i32
    %c0_i32_100 = arith.constant 0 : i32
    %108 = tpu.memref_slice %arg2[%107, %c0_i32_100] : memref<96x128xf32, #tpu.memory_space<any>> -> memref<1x128xf32, #tpu.memory_space<any>>
    %c6_i32_101 = arith.constant 6 : i32
    %c0_i32_102 = arith.constant 0 : i32
    %109 = tpu.memref_slice %arg5[%c1_i32_97, %c6_i32_101, %c0_i32_102] : memref<2x8x128xf32, #tpu.memory_space<vmem>> -> memref<1x1x128xf32, #tpu.memory_space<vmem>>
    %110 = tpu.memref_squeeze %109 : memref<1x1x128xf32, #tpu.memory_space<vmem>> -> memref<1x128xf32, #tpu.memory_space<vmem>>
    %111 = tpu.memref_slice %arg6[%c1_i32_98, %c6_i32_99] : memref<2x8x!tpu.dma_semaphore, #tpu.memory_space<semaphore_mem>> -> memref<1x1x!tpu.dma_semaphore, #tpu.memory_space<semaphore_mem>>
    %112 = tpu.memref_squeeze %111 : memref<1x1x!tpu.dma_semaphore, #tpu.memory_space<semaphore_mem>> -> memref<!tpu.dma_semaphore, #tpu.memory_space<semaphore_mem>>
    tpu.enqueue_dma source(%108 : memref<1x128xf32, #tpu.memory_space<any>>) target(%110 : memref<1x128xf32, #tpu.memory_space<vmem>>) target_semaphore(%112 : memref<!tpu.dma_semaphore, #tpu.memory_space<semaphore_mem>>)
    %c7_i32 = arith.constant 7 : i32
    %113 = arith.addi %0, %c7_i32 : i32
    %114 = arith.index_cast %113 : i32 to index
    %c0_103 = arith.constant 0 : index
    %115 = memref.load %arg1[%114, %c0_103] : memref<16x2xi32, #tpu.memory_space<smem>>
    %c0_i32_104 = arith.constant 0 : i32
    %c0_i32_105 = arith.constant 0 : i32
    %c7_i32_106 = arith.constant 7 : i32
    %c0_i32_107 = arith.constant 0 : i32
    %116 = tpu.memref_slice %arg2[%115, %c0_i32_107] : memref<96x128xf32, #tpu.memory_space<any>> -> memref<1x128xf32, #tpu.memory_space<any>>
    %c7_i32_108 = arith.constant 7 : i32
    %c0_i32_109 = arith.constant 0 : i32
    %117 = tpu.memref_slice %arg5[%c0_i32_104, %c7_i32_108, %c0_i32_109] : memref<2x8x128xf32, #tpu.memory_space<vmem>> -> memref<1x1x128xf32, #tpu.memory_space<vmem>>
    %118 = tpu.memref_squeeze %117 : memref<1x1x128xf32, #tpu.memory_space<vmem>> -> memref<1x128xf32, #tpu.memory_space<vmem>>
    %119 = tpu.memref_slice %arg6[%c0_i32_105, %c7_i32_106] : memref<2x8x!tpu.dma_semaphore, #tpu.memory_space<semaphore_mem>> -> memref<1x1x!tpu.dma_semaphore, #tpu.memory_space<semaphore_mem>>
    %120 = tpu.memref_squeeze %119 : memref<1x1x!tpu.dma_semaphore, #tpu.memory_space<semaphore_mem>> -> memref<!tpu.dma_semaphore, #tpu.memory_space<semaphore_mem>>
    tpu.enqueue_dma source(%116 : memref<1x128xf32, #tpu.memory_space<any>>) target(%118 : memref<1x128xf32, #tpu.memory_space<vmem>>) target_semaphore(%120 : memref<!tpu.dma_semaphore, #tpu.memory_space<semaphore_mem>>)
    %c7_i32_110 = arith.constant 7 : i32
    %121 = arith.addi %0, %c7_i32_110 : i32
    %122 = arith.index_cast %121 : i32 to index
    %c1_111 = arith.constant 1 : index
    %123 = memref.load %arg1[%122, %c1_111] : memref<16x2xi32, #tpu.memory_space<smem>>
    %c1_i32_112 = arith.constant 1 : i32
    %c1_i32_113 = arith.constant 1 : i32
    %c7_i32_114 = arith.constant 7 : i32
    %c0_i32_115 = arith.constant 0 : i32
    %124 = tpu.memref_slice %arg2[%123, %c0_i32_115] : memref<96x128xf32, #tpu.memory_space<any>> -> memref<1x128xf32, #tpu.memory_space<any>>
    %c7_i32_116 = arith.constant 7 : i32
    %c0_i32_117 = arith.constant 0 : i32
    %125 = tpu.memref_slice %arg5[%c1_i32_112, %c7_i32_116, %c0_i32_117] : memref<2x8x128xf32, #tpu.memory_space<vmem>> -> memref<1x1x128xf32, #tpu.memory_space<vmem>>
    %126 = tpu.memref_squeeze %125 : memref<1x1x128xf32, #tpu.memory_space<vmem>> -> memref<1x128xf32, #tpu.memory_space<vmem>>
    %127 = tpu.memref_slice %arg6[%c1_i32_113, %c7_i32_114] : memref<2x8x!tpu.dma_semaphore, #tpu.memory_space<semaphore_mem>> -> memref<1x1x!tpu.dma_semaphore, #tpu.memory_space<semaphore_mem>>
    %128 = tpu.memref_squeeze %127 : memref<1x1x!tpu.dma_semaphore, #tpu.memory_space<semaphore_mem>> -> memref<!tpu.dma_semaphore, #tpu.memory_space<semaphore_mem>>
    tpu.enqueue_dma source(%124 : memref<1x128xf32, #tpu.memory_space<any>>) target(%126 : memref<1x128xf32, #tpu.memory_space<vmem>>) target_semaphore(%128 : memref<!tpu.dma_semaphore, #tpu.memory_space<semaphore_mem>>)
    %c0_i32_118 = arith.constant 0 : i32
    %c0_i32_119 = arith.constant 0 : i32
    %c0_i32_120 = arith.constant 0 : i32
    %c0_i32_121 = arith.constant 0 : i32
    %129 = tpu.memref_slice %arg2[%3, %c0_i32_121] : memref<96x128xf32, #tpu.memory_space<any>> -> memref<1x128xf32, #tpu.memory_space<any>>
    %c0_i32_122 = arith.constant 0 : i32
    %c0_i32_123 = arith.constant 0 : i32
    %130 = tpu.memref_slice %arg5[%c0_i32_118, %c0_i32_122, %c0_i32_123] : memref<2x8x128xf32, #tpu.memory_space<vmem>> -> memref<1x1x128xf32, #tpu.memory_space<vmem>>
    %131 = tpu.memref_squeeze %130 : memref<1x1x128xf32, #tpu.memory_space<vmem>> -> memref<1x128xf32, #tpu.memory_space<vmem>>
    %132 = tpu.memref_slice %arg6[%c0_i32_119, %c0_i32_120] : memref<2x8x!tpu.dma_semaphore, #tpu.memory_space<semaphore_mem>> -> memref<1x1x!tpu.dma_semaphore, #tpu.memory_space<semaphore_mem>>
    %133 = tpu.memref_squeeze %132 : memref<1x1x!tpu.dma_semaphore, #tpu.memory_space<semaphore_mem>> -> memref<!tpu.dma_semaphore, #tpu.memory_space<semaphore_mem>>
    tpu.wait_dma2 semaphore(%133 : memref<!tpu.dma_semaphore, #tpu.memory_space<semaphore_mem>>) src(%129 : memref<1x128xf32, #tpu.memory_space<any>>) dst(%131 : memref<1x128xf32, #tpu.memory_space<vmem>>)
    %c1_i32_124 = arith.constant 1 : i32
    %c1_i32_125 = arith.constant 1 : i32
    %c0_i32_126 = arith.constant 0 : i32
    %c0_i32_127 = arith.constant 0 : i32
    %134 = tpu.memref_slice %arg2[%11, %c0_i32_127] : memref<96x128xf32, #tpu.memory_space<any>> -> memref<1x128xf32, #tpu.memory_space<any>>
    %c0_i32_128 = arith.constant 0 : i32
    %c0_i32_129 = arith.constant 0 : i32
    %135 = tpu.memref_slice %arg5[%c1_i32_124, %c0_i32_128, %c0_i32_129] : memref<2x8x128xf32, #tpu.memory_space<vmem>> -> memref<1x1x128xf32, #tpu.memory_space<vmem>>
    %136 = tpu.memref_squeeze %135 : memref<1x1x128xf32, #tpu.memory_space<vmem>> -> memref<1x128xf32, #tpu.memory_space<vmem>>
    %137 = tpu.memref_slice %arg6[%c1_i32_125, %c0_i32_126] : memref<2x8x!tpu.dma_semaphore, #tpu.memory_space<semaphore_mem>> -> memref<1x1x!tpu.dma_semaphore, #tpu.memory_space<semaphore_mem>>
    %138 = tpu.memref_squeeze %137 : memref<1x1x!tpu.dma_semaphore, #tpu.memory_space<semaphore_mem>> -> memref<!tpu.dma_semaphore, #tpu.memory_space<semaphore_mem>>
    tpu.wait_dma2 semaphore(%138 : memref<!tpu.dma_semaphore, #tpu.memory_space<semaphore_mem>>) src(%134 : memref<1x128xf32, #tpu.memory_space<any>>) dst(%136 : memref<1x128xf32, #tpu.memory_space<vmem>>)
    %c0_i32_130 = arith.constant 0 : i32
    %c0_i32_131 = arith.constant 0 : i32
    %c1_i32_132 = arith.constant 1 : i32
    %c0_i32_133 = arith.constant 0 : i32
    %139 = tpu.memref_slice %arg2[%19, %c0_i32_133] : memref<96x128xf32, #tpu.memory_space<any>> -> memref<1x128xf32, #tpu.memory_space<any>>
    %c1_i32_134 = arith.constant 1 : i32
    %c0_i32_135 = arith.constant 0 : i32
    %140 = tpu.memref_slice %arg5[%c0_i32_130, %c1_i32_134, %c0_i32_135] : memref<2x8x128xf32, #tpu.memory_space<vmem>> -> memref<1x1x128xf32, #tpu.memory_space<vmem>>
    %141 = tpu.memref_squeeze %140 : memref<1x1x128xf32, #tpu.memory_space<vmem>> -> memref<1x128xf32, #tpu.memory_space<vmem>>
    %142 = tpu.memref_slice %arg6[%c0_i32_131, %c1_i32_132] : memref<2x8x!tpu.dma_semaphore, #tpu.memory_space<semaphore_mem>> -> memref<1x1x!tpu.dma_semaphore, #tpu.memory_space<semaphore_mem>>
    %143 = tpu.memref_squeeze %142 : memref<1x1x!tpu.dma_semaphore, #tpu.memory_space<semaphore_mem>> -> memref<!tpu.dma_semaphore, #tpu.memory_space<semaphore_mem>>
    tpu.wait_dma2 semaphore(%143 : memref<!tpu.dma_semaphore, #tpu.memory_space<semaphore_mem>>) src(%139 : memref<1x128xf32, #tpu.memory_space<any>>) dst(%141 : memref<1x128xf32, #tpu.memory_space<vmem>>)
    %c1_i32_136 = arith.constant 1 : i32
    %c1_i32_137 = arith.constant 1 : i32
    %c1_i32_138 = arith.constant 1 : i32
    %c0_i32_139 = arith.constant 0 : i32
    %144 = tpu.memref_slice %arg2[%27, %c0_i32_139] : memref<96x128xf32, #tpu.memory_space<any>> -> memref<1x128xf32, #tpu.memory_space<any>>
    %c1_i32_140 = arith.constant 1 : i32
    %c0_i32_141 = arith.constant 0 : i32
    %145 = tpu.memref_slice %arg5[%c1_i32_136, %c1_i32_140, %c0_i32_141] : memref<2x8x128xf32, #tpu.memory_space<vmem>> -> memref<1x1x128xf32, #tpu.memory_space<vmem>>
    %146 = tpu.memref_squeeze %145 : memref<1x1x128xf32, #tpu.memory_space<vmem>> -> memref<1x128xf32, #tpu.memory_space<vmem>>
    %147 = tpu.memref_slice %arg6[%c1_i32_137, %c1_i32_138] : memref<2x8x!tpu.dma_semaphore, #tpu.memory_space<semaphore_mem>> -> memref<1x1x!tpu.dma_semaphore, #tpu.memory_space<semaphore_mem>>
    %148 = tpu.memref_squeeze %147 : memref<1x1x!tpu.dma_semaphore, #tpu.memory_space<semaphore_mem>> -> memref<!tpu.dma_semaphore, #tpu.memory_space<semaphore_mem>>
    tpu.wait_dma2 semaphore(%148 : memref<!tpu.dma_semaphore, #tpu.memory_space<semaphore_mem>>) src(%144 : memref<1x128xf32, #tpu.memory_space<any>>) dst(%146 : memref<1x128xf32, #tpu.memory_space<vmem>>)
    %c0_i32_142 = arith.constant 0 : i32
    %c0_i32_143 = arith.constant 0 : i32
    %c2_i32_144 = arith.constant 2 : i32
    %c0_i32_145 = arith.constant 0 : i32
    %149 = tpu.memref_slice %arg2[%35, %c0_i32_145] : memref<96x128xf32, #tpu.memory_space<any>> -> memref<1x128xf32, #tpu.memory_space<any>>
    %c2_i32_146 = arith.constant 2 : i32
    %c0_i32_147 = arith.constant 0 : i32
    %150 = tpu.memref_slice %arg5[%c0_i32_142, %c2_i32_146, %c0_i32_147] : memref<2x8x128xf32, #tpu.memory_space<vmem>> -> memref<1x1x128xf32, #tpu.memory_space<vmem>>
    %151 = tpu.memref_squeeze %150 : memref<1x1x128xf32, #tpu.memory_space<vmem>> -> memref<1x128xf32, #tpu.memory_space<vmem>>
    %152 = tpu.memref_slice %arg6[%c0_i32_143, %c2_i32_144] : memref<2x8x!tpu.dma_semaphore, #tpu.memory_space<semaphore_mem>> -> memref<1x1x!tpu.dma_semaphore, #tpu.memory_space<semaphore_mem>>
    %153 = tpu.memref_squeeze %152 : memref<1x1x!tpu.dma_semaphore, #tpu.memory_space<semaphore_mem>> -> memref<!tpu.dma_semaphore, #tpu.memory_space<semaphore_mem>>
    tpu.wait_dma2 semaphore(%153 : memref<!tpu.dma_semaphore, #tpu.memory_space<semaphore_mem>>) src(%149 : memref<1x128xf32, #tpu.memory_space<any>>) dst(%151 : memref<1x128xf32, #tpu.memory_space<vmem>>)
    %c1_i32_148 = arith.constant 1 : i32
    %c1_i32_149 = arith.constant 1 : i32
    %c2_i32_150 = arith.constant 2 : i32
    %c0_i32_151 = arith.constant 0 : i32
    %154 = tpu.memref_slice %arg2[%43, %c0_i32_151] : memref<96x128xf32, #tpu.memory_space<any>> -> memref<1x128xf32, #tpu.memory_space<any>>
    %c2_i32_152 = arith.constant 2 : i32
    %c0_i32_153 = arith.constant 0 : i32
    %155 = tpu.memref_slice %arg5[%c1_i32_148, %c2_i32_152, %c0_i32_153] : memref<2x8x128xf32, #tpu.memory_space<vmem>> -> memref<1x1x128xf32, #tpu.memory_space<vmem>>
    %156 = tpu.memref_squeeze %155 : memref<1x1x128xf32, #tpu.memory_space<vmem>> -> memref<1x128xf32, #tpu.memory_space<vmem>>
    %157 = tpu.memref_slice %arg6[%c1_i32_149, %c2_i32_150] : memref<2x8x!tpu.dma_semaphore, #tpu.memory_space<semaphore_mem>> -> memref<1x1x!tpu.dma_semaphore, #tpu.memory_space<semaphore_mem>>
    %158 = tpu.memref_squeeze %157 : memref<1x1x!tpu.dma_semaphore, #tpu.memory_space<semaphore_mem>> -> memref<!tpu.dma_semaphore, #tpu.memory_space<semaphore_mem>>
    tpu.wait_dma2 semaphore(%158 : memref<!tpu.dma_semaphore, #tpu.memory_space<semaphore_mem>>) src(%154 : memref<1x128xf32, #tpu.memory_space<any>>) dst(%156 : memref<1x128xf32, #tpu.memory_space<vmem>>)
    %c0_i32_154 = arith.constant 0 : i32
    %c0_i32_155 = arith.constant 0 : i32
    %c3_i32_156 = arith.constant 3 : i32
    %c0_i32_157 = arith.constant 0 : i32
    %159 = tpu.memref_slice %arg2[%51, %c0_i32_157] : memref<96x128xf32, #tpu.memory_space<any>> -> memref<1x128xf32, #tpu.memory_space<any>>
    %c3_i32_158 = arith.constant 3 : i32
    %c0_i32_159 = arith.constant 0 : i32
    %160 = tpu.memref_slice %arg5[%c0_i32_154, %c3_i32_158, %c0_i32_159] : memref<2x8x128xf32, #tpu.memory_space<vmem>> -> memref<1x1x128xf32, #tpu.memory_space<vmem>>
    %161 = tpu.memref_squeeze %160 : memref<1x1x128xf32, #tpu.memory_space<vmem>> -> memref<1x128xf32, #tpu.memory_space<vmem>>
    %162 = tpu.memref_slice %arg6[%c0_i32_155, %c3_i32_156] : memref<2x8x!tpu.dma_semaphore, #tpu.memory_space<semaphore_mem>> -> memref<1x1x!tpu.dma_semaphore, #tpu.memory_space<semaphore_mem>>
    %163 = tpu.memref_squeeze %162 : memref<1x1x!tpu.dma_semaphore, #tpu.memory_space<semaphore_mem>> -> memref<!tpu.dma_semaphore, #tpu.memory_space<semaphore_mem>>
    tpu.wait_dma2 semaphore(%163 : memref<!tpu.dma_semaphore, #tpu.memory_space<semaphore_mem>>) src(%159 : memref<1x128xf32, #tpu.memory_space<any>>) dst(%161 : memref<1x128xf32, #tpu.memory_space<vmem>>)
    %c1_i32_160 = arith.constant 1 : i32
    %c1_i32_161 = arith.constant 1 : i32
    %c3_i32_162 = arith.constant 3 : i32
    %c0_i32_163 = arith.constant 0 : i32
    %164 = tpu.memref_slice %arg2[%59, %c0_i32_163] : memref<96x128xf32, #tpu.memory_space<any>> -> memref<1x128xf32, #tpu.memory_space<any>>
    %c3_i32_164 = arith.constant 3 : i32
    %c0_i32_165 = arith.constant 0 : i32
    %165 = tpu.memref_slice %arg5[%c1_i32_160, %c3_i32_164, %c0_i32_165] : memref<2x8x128xf32, #tpu.memory_space<vmem>> -> memref<1x1x128xf32, #tpu.memory_space<vmem>>
    %166 = tpu.memref_squeeze %165 : memref<1x1x128xf32, #tpu.memory_space<vmem>> -> memref<1x128xf32, #tpu.memory_space<vmem>>
    %167 = tpu.memref_slice %arg6[%c1_i32_161, %c3_i32_162] : memref<2x8x!tpu.dma_semaphore, #tpu.memory_space<semaphore_mem>> -> memref<1x1x!tpu.dma_semaphore, #tpu.memory_space<semaphore_mem>>
    %168 = tpu.memref_squeeze %167 : memref<1x1x!tpu.dma_semaphore, #tpu.memory_space<semaphore_mem>> -> memref<!tpu.dma_semaphore, #tpu.memory_space<semaphore_mem>>
    tpu.wait_dma2 semaphore(%168 : memref<!tpu.dma_semaphore, #tpu.memory_space<semaphore_mem>>) src(%164 : memref<1x128xf32, #tpu.memory_space<any>>) dst(%166 : memref<1x128xf32, #tpu.memory_space<vmem>>)
    %c0_i32_166 = arith.constant 0 : i32
    %c0_i32_167 = arith.constant 0 : i32
    %c4_i32_168 = arith.constant 4 : i32
    %c0_i32_169 = arith.constant 0 : i32
    %169 = tpu.memref_slice %arg2[%67, %c0_i32_169] : memref<96x128xf32, #tpu.memory_space<any>> -> memref<1x128xf32, #tpu.memory_space<any>>
    %c4_i32_170 = arith.constant 4 : i32
    %c0_i32_171 = arith.constant 0 : i32
    %170 = tpu.memref_slice %arg5[%c0_i32_166, %c4_i32_170, %c0_i32_171] : memref<2x8x128xf32, #tpu.memory_space<vmem>> -> memref<1x1x128xf32, #tpu.memory_space<vmem>>
    %171 = tpu.memref_squeeze %170 : memref<1x1x128xf32, #tpu.memory_space<vmem>> -> memref<1x128xf32, #tpu.memory_space<vmem>>
    %172 = tpu.memref_slice %arg6[%c0_i32_167, %c4_i32_168] : memref<2x8x!tpu.dma_semaphore, #tpu.memory_space<semaphore_mem>> -> memref<1x1x!tpu.dma_semaphore, #tpu.memory_space<semaphore_mem>>
    %173 = tpu.memref_squeeze %172 : memref<1x1x!tpu.dma_semaphore, #tpu.memory_space<semaphore_mem>> -> memref<!tpu.dma_semaphore, #tpu.memory_space<semaphore_mem>>
    tpu.wait_dma2 semaphore(%173 : memref<!tpu.dma_semaphore, #tpu.memory_space<semaphore_mem>>) src(%169 : memref<1x128xf32, #tpu.memory_space<any>>) dst(%171 : memref<1x128xf32, #tpu.memory_space<vmem>>)
    %c1_i32_172 = arith.constant 1 : i32
    %c1_i32_173 = arith.constant 1 : i32
    %c4_i32_174 = arith.constant 4 : i32
    %c0_i32_175 = arith.constant 0 : i32
    %174 = tpu.memref_slice %arg2[%75, %c0_i32_175] : memref<96x128xf32, #tpu.memory_space<any>> -> memref<1x128xf32, #tpu.memory_space<any>>
    %c4_i32_176 = arith.constant 4 : i32
    %c0_i32_177 = arith.constant 0 : i32
    %175 = tpu.memref_slice %arg5[%c1_i32_172, %c4_i32_176, %c0_i32_177] : memref<2x8x128xf32, #tpu.memory_space<vmem>> -> memref<1x1x128xf32, #tpu.memory_space<vmem>>
    %176 = tpu.memref_squeeze %175 : memref<1x1x128xf32, #tpu.memory_space<vmem>> -> memref<1x128xf32, #tpu.memory_space<vmem>>
    %177 = tpu.memref_slice %arg6[%c1_i32_173, %c4_i32_174] : memref<2x8x!tpu.dma_semaphore, #tpu.memory_space<semaphore_mem>> -> memref<1x1x!tpu.dma_semaphore, #tpu.memory_space<semaphore_mem>>
    %178 = tpu.memref_squeeze %177 : memref<1x1x!tpu.dma_semaphore, #tpu.memory_space<semaphore_mem>> -> memref<!tpu.dma_semaphore, #tpu.memory_space<semaphore_mem>>
    tpu.wait_dma2 semaphore(%178 : memref<!tpu.dma_semaphore, #tpu.memory_space<semaphore_mem>>) src(%174 : memref<1x128xf32, #tpu.memory_space<any>>) dst(%176 : memref<1x128xf32, #tpu.memory_space<vmem>>)
    %c0_i32_178 = arith.constant 0 : i32
    %c0_i32_179 = arith.constant 0 : i32
    %c5_i32_180 = arith.constant 5 : i32
    %c0_i32_181 = arith.constant 0 : i32
    %179 = tpu.memref_slice %arg2[%83, %c0_i32_181] : memref<96x128xf32, #tpu.memory_space<any>> -> memref<1x128xf32, #tpu.memory_space<any>>
    %c5_i32_182 = arith.constant 5 : i32
    %c0_i32_183 = arith.constant 0 : i32
    %180 = tpu.memref_slice %arg5[%c0_i32_178, %c5_i32_182, %c0_i32_183] : memref<2x8x128xf32, #tpu.memory_space<vmem>> -> memref<1x1x128xf32, #tpu.memory_space<vmem>>
    %181 = tpu.memref_squeeze %180 : memref<1x1x128xf32, #tpu.memory_space<vmem>> -> memref<1x128xf32, #tpu.memory_space<vmem>>
    %182 = tpu.memref_slice %arg6[%c0_i32_179, %c5_i32_180] : memref<2x8x!tpu.dma_semaphore, #tpu.memory_space<semaphore_mem>> -> memref<1x1x!tpu.dma_semaphore, #tpu.memory_space<semaphore_mem>>
    %183 = tpu.memref_squeeze %182 : memref<1x1x!tpu.dma_semaphore, #tpu.memory_space<semaphore_mem>> -> memref<!tpu.dma_semaphore, #tpu.memory_space<semaphore_mem>>
    tpu.wait_dma2 semaphore(%183 : memref<!tpu.dma_semaphore, #tpu.memory_space<semaphore_mem>>) src(%179 : memref<1x128xf32, #tpu.memory_space<any>>) dst(%181 : memref<1x128xf32, #tpu.memory_space<vmem>>)
    %c1_i32_184 = arith.constant 1 : i32
    %c1_i32_185 = arith.constant 1 : i32
    %c5_i32_186 = arith.constant 5 : i32
    %c0_i32_187 = arith.constant 0 : i32
    %184 = tpu.memref_slice %arg2[%91, %c0_i32_187] : memref<96x128xf32, #tpu.memory_space<any>> -> memref<1x128xf32, #tpu.memory_space<any>>
    %c5_i32_188 = arith.constant 5 : i32
    %c0_i32_189 = arith.constant 0 : i32
    %185 = tpu.memref_slice %arg5[%c1_i32_184, %c5_i32_188, %c0_i32_189] : memref<2x8x128xf32, #tpu.memory_space<vmem>> -> memref<1x1x128xf32, #tpu.memory_space<vmem>>
    %186 = tpu.memref_squeeze %185 : memref<1x1x128xf32, #tpu.memory_space<vmem>> -> memref<1x128xf32, #tpu.memory_space<vmem>>
    %187 = tpu.memref_slice %arg6[%c1_i32_185, %c5_i32_186] : memref<2x8x!tpu.dma_semaphore, #tpu.memory_space<semaphore_mem>> -> memref<1x1x!tpu.dma_semaphore, #tpu.memory_space<semaphore_mem>>
    %188 = tpu.memref_squeeze %187 : memref<1x1x!tpu.dma_semaphore, #tpu.memory_space<semaphore_mem>> -> memref<!tpu.dma_semaphore, #tpu.memory_space<semaphore_mem>>
    tpu.wait_dma2 semaphore(%188 : memref<!tpu.dma_semaphore, #tpu.memory_space<semaphore_mem>>) src(%184 : memref<1x128xf32, #tpu.memory_space<any>>) dst(%186 : memref<1x128xf32, #tpu.memory_space<vmem>>)
    %c0_i32_190 = arith.constant 0 : i32
    %c0_i32_191 = arith.constant 0 : i32
    %c6_i32_192 = arith.constant 6 : i32
    %c0_i32_193 = arith.constant 0 : i32
    %189 = tpu.memref_slice %arg2[%99, %c0_i32_193] : memref<96x128xf32, #tpu.memory_space<any>> -> memref<1x128xf32, #tpu.memory_space<any>>
    %c6_i32_194 = arith.constant 6 : i32
    %c0_i32_195 = arith.constant 0 : i32
    %190 = tpu.memref_slice %arg5[%c0_i32_190, %c6_i32_194, %c0_i32_195] : memref<2x8x128xf32, #tpu.memory_space<vmem>> -> memref<1x1x128xf32, #tpu.memory_space<vmem>>
    %191 = tpu.memref_squeeze %190 : memref<1x1x128xf32, #tpu.memory_space<vmem>> -> memref<1x128xf32, #tpu.memory_space<vmem>>
    %192 = tpu.memref_slice %arg6[%c0_i32_191, %c6_i32_192] : memref<2x8x!tpu.dma_semaphore, #tpu.memory_space<semaphore_mem>> -> memref<1x1x!tpu.dma_semaphore, #tpu.memory_space<semaphore_mem>>
    %193 = tpu.memref_squeeze %192 : memref<1x1x!tpu.dma_semaphore, #tpu.memory_space<semaphore_mem>> -> memref<!tpu.dma_semaphore, #tpu.memory_space<semaphore_mem>>
    tpu.wait_dma2 semaphore(%193 : memref<!tpu.dma_semaphore, #tpu.memory_space<semaphore_mem>>) src(%189 : memref<1x128xf32, #tpu.memory_space<any>>) dst(%191 : memref<1x128xf32, #tpu.memory_space<vmem>>)
    %c1_i32_196 = arith.constant 1 : i32
    %c1_i32_197 = arith.constant 1 : i32
    %c6_i32_198 = arith.constant 6 : i32
    %c0_i32_199 = arith.constant 0 : i32
    %194 = tpu.memref_slice %arg2[%107, %c0_i32_199] : memref<96x128xf32, #tpu.memory_space<any>> -> memref<1x128xf32, #tpu.memory_space<any>>
    %c6_i32_200 = arith.constant 6 : i32
    %c0_i32_201 = arith.constant 0 : i32
    %195 = tpu.memref_slice %arg5[%c1_i32_196, %c6_i32_200, %c0_i32_201] : memref<2x8x128xf32, #tpu.memory_space<vmem>> -> memref<1x1x128xf32, #tpu.memory_space<vmem>>
    %196 = tpu.memref_squeeze %195 : memref<1x1x128xf32, #tpu.memory_space<vmem>> -> memref<1x128xf32, #tpu.memory_space<vmem>>
    %197 = tpu.memref_slice %arg6[%c1_i32_197, %c6_i32_198] : memref<2x8x!tpu.dma_semaphore, #tpu.memory_space<semaphore_mem>> -> memref<1x1x!tpu.dma_semaphore, #tpu.memory_space<semaphore_mem>>
    %198 = tpu.memref_squeeze %197 : memref<1x1x!tpu.dma_semaphore, #tpu.memory_space<semaphore_mem>> -> memref<!tpu.dma_semaphore, #tpu.memory_space<semaphore_mem>>
    tpu.wait_dma2 semaphore(%198 : memref<!tpu.dma_semaphore, #tpu.memory_space<semaphore_mem>>) src(%194 : memref<1x128xf32, #tpu.memory_space<any>>) dst(%196 : memref<1x128xf32, #tpu.memory_space<vmem>>)
    %c0_i32_202 = arith.constant 0 : i32
    %c0_i32_203 = arith.constant 0 : i32
    %c7_i32_204 = arith.constant 7 : i32
    %c0_i32_205 = arith.constant 0 : i32
    %199 = tpu.memref_slice %arg2[%115, %c0_i32_205] : memref<96x128xf32, #tpu.memory_space<any>> -> memref<1x128xf32, #tpu.memory_space<any>>
    %c7_i32_206 = arith.constant 7 : i32
    %c0_i32_207 = arith.constant 0 : i32
    %200 = tpu.memref_slice %arg5[%c0_i32_202, %c7_i32_206, %c0_i32_207] : memref<2x8x128xf32, #tpu.memory_space<vmem>> -> memref<1x1x128xf32, #tpu.memory_space<vmem>>
    %201 = tpu.memref_squeeze %200 : memref<1x1x128xf32, #tpu.memory_space<vmem>> -> memref<1x128xf32, #tpu.memory_space<vmem>>
    %202 = tpu.memref_slice %arg6[%c0_i32_203, %c7_i32_204] : memref<2x8x!tpu.dma_semaphore, #tpu.memory_space<semaphore_mem>> -> memref<1x1x!tpu.dma_semaphore, #tpu.memory_space<semaphore_mem>>
    %203 = tpu.memref_squeeze %202 : memref<1x1x!tpu.dma_semaphore, #tpu.memory_space<semaphore_mem>> -> memref<!tpu.dma_semaphore, #tpu.memory_space<semaphore_mem>>
    tpu.wait_dma2 semaphore(%203 : memref<!tpu.dma_semaphore, #tpu.memory_space<semaphore_mem>>) src(%199 : memref<1x128xf32, #tpu.memory_space<any>>) dst(%201 : memref<1x128xf32, #tpu.memory_space<vmem>>)
    %c1_i32_208 = arith.constant 1 : i32
    %c1_i32_209 = arith.constant 1 : i32
    %c7_i32_210 = arith.constant 7 : i32
    %c0_i32_211 = arith.constant 0 : i32
    %204 = tpu.memref_slice %arg2[%123, %c0_i32_211] : memref<96x128xf32, #tpu.memory_space<any>> -> memref<1x128xf32, #tpu.memory_space<any>>
    %c7_i32_212 = arith.constant 7 : i32
    %c0_i32_213 = arith.constant 0 : i32
    %205 = tpu.memref_slice %arg5[%c1_i32_208, %c7_i32_212, %c0_i32_213] : memref<2x8x128xf32, #tpu.memory_space<vmem>> -> memref<1x1x128xf32, #tpu.memory_space<vmem>>
    %206 = tpu.memref_squeeze %205 : memref<1x1x128xf32, #tpu.memory_space<vmem>> -> memref<1x128xf32, #tpu.memory_space<vmem>>
    %207 = tpu.memref_slice %arg6[%c1_i32_209, %c7_i32_210] : memref<2x8x!tpu.dma_semaphore, #tpu.memory_space<semaphore_mem>> -> memref<1x1x!tpu.dma_semaphore, #tpu.memory_space<semaphore_mem>>
    %208 = tpu.memref_squeeze %207 : memref<1x1x!tpu.dma_semaphore, #tpu.memory_space<semaphore_mem>> -> memref<!tpu.dma_semaphore, #tpu.memory_space<semaphore_mem>>
    tpu.wait_dma2 semaphore(%208 : memref<!tpu.dma_semaphore, #tpu.memory_space<semaphore_mem>>) src(%204 : memref<1x128xf32, #tpu.memory_space<any>>) dst(%206 : memref<1x128xf32, #tpu.memory_space<vmem>>)
    %c0_214 = arith.constant 0 : index
    %c0_215 = arith.constant 0 : index
    %c0_216 = arith.constant 0 : index
    %209 = vector.load %arg5[%c0_214, %c0_215, %c0_216] : memref<2x8x128xf32, #tpu.memory_space<vmem>>, vector<1x8x128xf32>
    %210 = vector.shape_cast %209 : vector<1x8x128xf32> to vector<8x128xf32>
    %211 = arith.mulf %210, %210 : vector<8x128xf32>
    %c1_217 = arith.constant 1 : index
    %c0_218 = arith.constant 0 : index
    %c0_219 = arith.constant 0 : index
    %212 = vector.load %arg5[%c1_217, %c0_218, %c0_219] : memref<2x8x128xf32, #tpu.memory_space<vmem>>, vector<1x8x128xf32>
    %213 = vector.shape_cast %212 : vector<1x8x128xf32> to vector<8x128xf32>
    %214 = arith.addf %210, %213 : vector<8x128xf32>
    %215 = arith.mulf %213, %213 : vector<8x128xf32>
    %216 = arith.addf %211, %215 : vector<8x128xf32>
    %217 = tpu.iota {dimensions = array<i32: 1>} : vector<8x128xi32>
    %c16_i32 = arith.constant 16 : i32
    %218 = vector.broadcast %c16_i32 : i32 to vector<8x128xi32>
    %219 = arith.cmpi slt, %217, %218 : vector<8x128xi32>
    %220 = arith.mulf %214, %214 : vector<8x128xf32>
    %221 = arith.subf %220, %216 : vector<8x128xf32>
    %cst = arith.constant 0.000000e+00 : f32
    %222 = vector.broadcast %cst : f32 to vector<8x128xf32>
    %223 = arith.select %219, %221, %222 : vector<8x128xi1>, vector<8x128xf32>
    %c16_i32_220 = arith.constant 16 : i32
    %224 = vector.broadcast %c16_i32_220 : i32 to vector<8x128xi32>
    %225 = arith.cmpi eq, %217, %224 : vector<8x128xi32>
    %cst_221 = arith.constant 0.000000e+00 : f32
    %226 = vector.broadcast %cst_221 : f32 to vector<8x128xf32>
    %227 = arith.select %225, %214, %226 : vector<8x128xi1>, vector<8x128xf32>
    %cst_222 = arith.constant 5.000000e-01 : f32
    %228 = vector.broadcast %cst_222 : f32 to vector<8x128xf32>
    %229 = arith.mulf %228, %223 : vector<8x128xf32>
    %230 = arith.addf %229, %227 : vector<8x128xf32>
    %cst_223 = arith.constant dense<0.000000e+00> : vector<8xf32>
    %231 = vector.multi_reduction <add>, %230, %cst_223 [1] : vector<8x128xf32> to vector<8xf32>
    %232 = vector.shape_cast %231 : vector<8xf32> to vector<8x1xf32>
    %c0_224 = arith.constant 0 : index
    %c0_225 = arith.constant 0 : index
    %233 = memref.load %arg3[%c0_224, %c0_225] : memref<1x1xf32, #tpu.memory_space<smem>>
    %234 = vector.broadcast %233 : f32 to vector<8x1xf32>
    %235 = arith.addf %232, %234 : vector<8x1xf32>
    %c0_226 = arith.constant 0 : index
    %c0_227 = arith.constant 0 : index
    %236 = vector.load %arg4[%c0_226, %c0_227] : memref<8x1xf32, #tpu.memory_space<vmem>>, vector<8x1xf32>
    tpu.vector_store %arg4[%c0_226, %c0_227], %235 {strides = array<i32>} : memref<8x1xf32, #tpu.memory_space<vmem>>, vector<8x1xf32>,
    return
  }
  func.func @transform_1(%arg0: i32, %arg1: memref<16x2xi32, #tpu.memory_space<smem>>) -> (i32, i32) {
    %c0_i32 = arith.constant 0 : i32
    %c0_i32_0 = arith.constant 0 : i32
    %c0_i32_1 = arith.constant 0 : i32
    return %c0_i32, %c0_i32_0 : i32, i32
  }
  func.func @transform_2(%arg0: i32, %arg1: memref<16x2xi32, #tpu.memory_space<smem>>) -> (i32, i32) {
    %c0_i32 = arith.constant 0 : i32
    %c0_i32_0 = arith.constant 0 : i32
    return %arg0, %c0_i32 : i32, i32
  }
}

</mosaic_0001>

<llo_original>
// kernel: tpu_custom_call.1
$region0: #{tpu_custom_call.1}
  #allocation0 [shape = 'u32[]', space=smem, size = 0x4, offset = 0x4, fixed_abs, tag = 'smem constant byte address 0x4 - core index']
  #allocation1 [shape = 'u32[144,128]{1,0:T(1,128)}', space=vmem, size = 0x12000, scoped, tag = 'internal scratch']
  #allocation2 [shape = 'f32[2,8,128]{2,1,0:T(8,128)}', space=vmem, size = 0x2000, scoped, tag = 'scratch operand']
  #allocation3 [shape = 's32[16]{0}', space=sflag, size = 0x40, scoped, tag = 'scratch operand']
  #allocation4 [shape = 's32[1]{0}', space=sflag, size = 0x4, scoped, tag = 'scoped memory for tpu_custom_call.1']
  #allocation5 [shape = 'u8[8192]{0}', space=smem, size = 0x2000, scoped, tag = 'prefetched SMEM operand 0']
  #allocation6 [shape = 'f32[1,1]{1,0:T(1,128)S(6)}', space=smem, size = 0x200, scoped, tag = 'scoped memory for tpu_custom_call.1']
  #allocation7 [shape = 's32[]', space=sflag, size = 0x4, offset = 0, fixed_abs, tag = 'sflag constant byte address 0x0 - dummy sync flag']
  #allocation8 [shape = 's32[]', space=sflag, size = 0x4, offset = 0, fixed_abs, tag = 'sflag constant byte address 0x0 - dummy sync flag']
  #allocation9 [shape = 'u32[]', space=smem, size = 0x4, offset = 0x44, fixed_abs, tag = 'smem constant byte address 0x44 - assertion arg 0']
  #allocation10 [shape = 'u32[]', space=smem, size = 0x4, offset = 0x48, fixed_abs, tag = 'smem constant byte address 0x48 - assertion arg 1']
  #allocation11 [shape = 's32[]', space=sflag, size = 0x4, offset = 0, fixed_abs, tag = 'sflag constant byte address 0x0 - dummy sync flag']
  #allocation12 [shape = 's32[]', space=sflag, size = 0x4, offset = 0, fixed_abs, tag = 'sflag constant byte address 0x0 - dummy sync flag']
  #allocation13 [shape = 's32[]', space=sflag, size = 0x4, offset = 0, fixed_abs, tag = 'sflag constant byte address 0x0 - dummy sync flag']
  #allocation14 [shape = 's32[]', space=sflag, size = 0x4, offset = 0, fixed_abs, tag = 'sflag constant byte address 0x0 - dummy sync flag']
  #allocation15 [shape = 's32[]', space=sflag, size = 0x4, offset = 0, fixed_abs, tag = 'sflag constant byte address 0x0 - dummy sync flag']
  #allocation16 [shape = 's32[]', space=sflag, size = 0x4, offset = 0, fixed_abs, tag = 'sflag constant byte address 0x0 - dummy sync flag']
  #allocation17 [shape = 's32[]', space=sflag, size = 0x4, offset = 0, fixed_abs, tag = 'sflag constant byte address 0x0 - dummy sync flag']
  #allocation18 [shape = 's32[]', space=sflag, size = 0x4, offset = 0, fixed_abs, tag = 'sflag constant byte address 0x0 - dummy sync flag']
  #allocation19 [shape = 's32[]', space=sflag, size = 0x4, offset = 0, fixed_abs, tag = 'sflag constant byte address 0x0 - dummy sync flag']
  #allocation20 [shape = 's32[]', space=sflag, size = 0x4, offset = 0, fixed_abs, tag = 'sflag constant byte address 0x0 - dummy sync flag']
  #allocation21 [shape = 's32[]', space=sflag, size = 0x4, offset = 0, fixed_abs, tag = 'sflag constant byte address 0x0 - dummy sync flag']
  #allocation22 [shape = 's32[]', space=sflag, size = 0x4, offset = 0, fixed_abs, tag = 'sflag constant byte address 0x0 - dummy sync flag']
  #allocation23 [shape = 's32[]', space=sflag, size = 0x4, offset = 0, fixed_abs, tag = 'sflag constant byte address 0x0 - dummy sync flag']
  #allocation24 [shape = 's32[]', space=sflag, size = 0x4, offset = 0, fixed_abs, tag = 'sflag constant byte address 0x0 - dummy sync flag']
  #allocation25 [shape = 's32[]', space=sflag, size = 0x4, offset = 0, fixed_abs, tag = 'sflag constant byte address 0x0 - dummy sync flag']
  #allocation26 [shape = 's32[]', space=sflag, size = 0x4, offset = 0, fixed_abs, tag = 'sflag constant byte address 0x0 - dummy sync flag']
  #allocation27 [shape = 's32[]', space=sflag, size = 0x4, offset = 0, fixed_abs, tag = 'sflag constant byte address 0x0 - dummy sync flag']
  #allocation28 [shape = 's32[]', space=sflag, size = 0x4, offset = 0, fixed_abs, tag = 'sflag constant byte address 0x0 - dummy sync flag']
  #allocation29 [shape = 's32[]', space=sflag, size = 0x4, offset = 0, fixed_abs, tag = 'sflag constant byte address 0x0 - dummy sync flag']
  #allocation30 [shape = 's32[]', space=sflag, size = 0x4, offset = 0, fixed_abs, tag = 'sflag constant byte address 0x0 - dummy sync flag']
  #allocation31 [shape = 's32[]', space=sflag, size = 0x4, offset = 0, fixed_abs, tag = 'sflag constant byte address 0x0 - dummy sync flag']
  #allocation32 [shape = 's32[]', space=sflag, size = 0x4, offset = 0, fixed_abs, tag = 'sflag constant byte address 0x0 - dummy sync flag']
  #allocation33 [shape = 's32[]', space=sflag, size = 0x4, offset = 0, fixed_abs, tag = 'sflag constant byte address 0x0 - dummy sync flag']
  #allocation34 [shape = 's32[]', space=sflag, size = 0x4, offset = 0, fixed_abs, tag = 'sflag constant byte address 0x0 - dummy sync flag']
  #allocation35 [shape = 's32[]', space=sflag, size = 0x4, offset = 0, fixed_abs, tag = 'sflag constant byte address 0x0 - dummy sync flag']
  #allocation36 [shape = 's32[]', space=sflag, size = 0x4, offset = 0, fixed_abs, tag = 'sflag constant byte address 0x0 - dummy sync flag']
  #allocation37 [shape = 's32[]', space=sflag, size = 0x4, offset = 0, fixed_abs, tag = 'sflag constant byte address 0x0 - dummy sync flag']
  #allocation38 [shape = 's32[]', space=sflag, size = 0x4, offset = 0, fixed_abs, tag = 'sflag constant byte address 0x0 - dummy sync flag']
  #allocation39 [shape = 's32[]', space=sflag, size = 0x4, offset = 0, fixed_abs, tag = 'sflag constant byte address 0x0 - dummy sync flag']
  #allocation40 [shape = 's32[]', space=sflag, size = 0x4, offset = 0, fixed_abs, tag = 'sflag constant byte address 0x0 - dummy sync flag']
  %s0 = inlined_call_operand.vmem [shape: s32[16,2], index: 0, kind: input, shape index: {}]
  %s1 = inlined_call_operand.hbm [shape: f32[96,128], index: 1, kind: input, shape index: {}]
  %s2 = inlined_call_operand.<no memory space> [shape: f32[1,1], index: 2, kind: input, shape index: {}]
  %s3 = inlined_call_operand.vmem [shape: f32[16,1], index: 3, kind: output, shape index: {}]
  %s4 = sld [smem:[#allocation0]]
  $region101: #{tpu_custom_call.1} parent=0
    _
  %s6 = ssub.s32 1, %s4
  %s7 = scalar_select 0, %s6, %s4
  %s8 = sshll.u32 %s0, 4
  %s9 = int_to_ptr.vmem [resolvable:$true] %s8
  %11 = dma.vmem_to_smem %s9, 256, [#allocation5], [#allocation4]
  %12 = sst [smem:[#allocation6]] %s2
  %13 = dma.done [#allocation4], 256
  %14 = sfence
  loop: start=0, step=1, limit=4
  $region2: #{tpu_custom_call.1} parent=0 // loop_pre_header
    _
  $region3: #{tpu_custom_call.1} parent=0 // loop_header
    %s16 = sphi 0, %s20
    %p17 = scmp.ge.s32.totalorder %s16, 4
    %s24 = sphi 0, %s24
    %s26 = sphi 0, %s24
    %s27 = sphi 0, %s26
    %s41 = sphi 0, %s27
    %s47 = sphi 0, %s49
    %s50 = sphi 0, %s47
    %s51 = sphi 0, %s50
    %s67 = sphi 0, %s51
  $region4: #{tpu_custom_call.1} parent=0 // loop_header_branch
    %19 = sbr.rel (%p17) target = $region8
  $region5: #{tpu_custom_call.1} parent=0 // loop_body
    %s21 = ssub.s32 %s16, 1
    %s22 = ssub.s32 %s16, 2
    %s23 = sadd.s32 %s16, 1
    %s25 = sadd.s32 %s24, 1
    %p28 = scmp.eq.s32.totalorder %s16, 1
    %p29 = scmp.ne.s32.totalorder %s24, %s26
    %p30 = scmp.eq.s32.totalorder %s16, 0
    %p31 = por %p29, %p30
    %p32 = scmp.ne.s32.totalorder %s24, %s26
    %p33 = scmp.eq.s32.totalorder %s21, 1
    %p34 = por %p32, %p33
    %p35 = scmp.ne.s32.totalorder %s26, %s27
    %p36 = scmp.eq.s32.totalorder %s21, 0
    %p37 = por %p35, %p36
    %p38 = scmp.ne.s32.totalorder %s26, %s27
    %p39 = scmp.eq.s32.totalorder %s22, 1
    %p40 = por %p38, %p39
    %p42 = scmp.ne.s32.totalorder %s27, %s41
    %p43 = scmp.eq.s32.totalorder %s22, 0
    %p44 = por %p42, %p43
    %s45 = ssub.s32 %s16, %s23
    %p46 = scmp.eq.s32.totalorder %s45, 0
    %s48 = sadd.s32 %s47, 1
    %s49 = scalar_select %p46, %s47, %s48
    %p52 = pneg %p46
    %p53 = scmp.eq.s32.totalorder %s16, 1
    %p54 = por %p52, %p53
    %p55 = scmp.ne.s32.totalorder %s47, %s50
    %p56 = scmp.eq.s32.totalorder %s16, 0
    %p57 = por %p55, %p56
    %p58 = scmp.ne.s32.totalorder %s47, %s50
    %p59 = scmp.eq.s32.totalorder %s21, 1
    %p60 = por %p58, %p59
    %p61 = scmp.ne.s32.totalorder %s50, %s51
    %p62 = scmp.eq.s32.totalorder %s21, 0
    %p63 = por %p61, %p62
    %p64 = scmp.ne.s32.totalorder %s50, %s51
    %p65 = scmp.eq.s32.totalorder %s22, 1
    %p66 = por %p64, %p65
    %p68 = scmp.ne.s32.totalorder %s51, %s67
    %p69 = scmp.eq.s32.totalorder %s22, 0
    %p70 = por %p68, %p69
    %p71 = scmp.le.s32.totalorder 1, %s16
    %p72 = scmp.lt.s32.totalorder %s16, 3
    %p73 = pnand %p71, %p72
    %p74 = pneg %p73
    // Predicated region
    $region9: #{tpu_custom_call.1} parent=5 // pred_check
      _
    $region10: #{tpu_custom_call.1} parent=5 // pred_check_branch
      %76 = sbr.rel (%p73) target = $region12
    $region11: #{tpu_custom_call.1} parent=5 // pred_region
      %s77 = ssub.s32 %s16, 1
      // Predicated region
      $region13: #{tpu_custom_call.1} parent=11 // pred_check
        %p78 = pneg %p37
      $region14: #{tpu_custom_call.1} parent=11 // pred_check_branch
        %80 = sbr.rel (%p78) target = $region16
      $region15: #{tpu_custom_call.1} parent=11 // pred_region
        _
      $region16: #{tpu_custom_call.1} parent=11 // pred_fallthru
        _
    $region12: #{tpu_custom_call.1} parent=5 // pred_fallthru
      _
    %p81 = scmp.lt.s32.totalorder %s16, 2
    // Predicated region
    $region17: #{tpu_custom_call.1} parent=5 // pred_check
      %p82 = pneg %p81
    $region18: #{tpu_custom_call.1} parent=5 // pred_check_branch
      %84 = sbr.rel (%p82) target = $region20
    $region19: #{tpu_custom_call.1} parent=5 // pred_region
      _
    $region20: #{tpu_custom_call.1} parent=5 // pred_fallthru
      _
    %p85 = scmp.le.s32.totalorder 1, %s16
    %p86 = scmp.lt.s32.totalorder %s16, 3
    %p87 = pnand %p85, %p86
    %p88 = pneg %p87
    // Predicated region
    $region21: #{tpu_custom_call.1} parent=5 // pred_check
      _
    $region22: #{tpu_custom_call.1} parent=5 // pred_check_branch
      %90 = sbr.rel (%p87) target = $region24
    $region23: #{tpu_custom_call.1} parent=5 // pred_region
      %s91 = ssub.s32 %s16, 1
      %p92 = pneg %p37
      %p93 = pneg %p34
      %p94 = pneg %p63
      %p95 = pneg %p60
      %p96 = scmp.lt.s32.totalorder %s21, 1
      %s97 = scalar_select %p96, %s21, 1
      %s98 = smul.addr %s97, 8
      %s99 = scalar_lea.vmem %s3, %s98
      %p100 = scmp.lt.s32.totalorder %s21, 1
      %s101 = scalar_select %p100, %s21, 1
      %s102 = smul.addr %s101, 8
      %s103 = scalar_lea.vmem %s3, %s102
      %s104 = smul.u32 %s21, 8
      %s105 = smul.u32 %s104, 128
      %s106 = sld [smem:[#allocation5 + %s105]]
      %s107 = smul.addr %s106, 16
      %s108 = scalar_lea.hbm %s1, %s107
      // Predicated region
      $region25: #{tpu_custom_call.1} parent=23 // pred_check
        _
      $region26: #{tpu_custom_call.1} parent=23 // pred_check_branch
        %110 = sbr.rel target = $region28
      $region27: #{tpu_custom_call.1} parent=23 // pred_region
        %111 = sst [smem:[#allocation9]] [#allocation8]
        %112 = sst [smem:[#allocation10]] [#allocation7]
      $region28: #{tpu_custom_call.1} parent=23 // pred_fallthru
        _
      %114 = shalt.err (0)
      %s116 = sshll.u32 [#allocation2], 4
      %s117 = int_to_ptr.vmem [resolvable:$true] %s116
      %119 = dma.hbm_to_vmem [thread:$0]  %s108, 16, %s117, [#allocation3]
      %s120 = sadd.s32 %s105, 1
      %s121 = sld [smem:[#allocation5 + %s120]]
      %s122 = smul.addr %s121, 16
      %s123 = scalar_lea.hbm %s1, %s122
      %s124 = scalar_lea.vmem [#allocation2], 8
      %s125 = scalar_lea.sflag [#allocation3], 8
      // Predicated region
      $region29: #{tpu_custom_call.1} parent=23 // pred_check
        _
      $region30: #{tpu_custom_call.1} parent=23 // pred_check_branch
        %127 = sbr.rel target = $region32
      $region31: #{tpu_custom_call.1} parent=23 // pred_region
        %128 = sst [smem:[#allocation9]] [#allocation12]
        %129 = sst [smem:[#allocation10]] [#allocation11]
      $region32: #{tpu_custom_call.1} parent=23 // pred_fallthru
        _
      %131 = shalt.err (0)
      %s133 = sshll.u32 %s124, 4
      %s134 = int_to_ptr.vmem [resolvable:$true] %s133
      %136 = dma.hbm_to_vmem [thread:$0]  %s123, 16, %s134, %s125
      %s137 = sadd.s32 %s104, 1
      %s138 = smul.u32 %s137, 128
      %s139 = sld [smem:[#allocation5 + %s138]]
      %s140 = smul.addr %s139, 16
      %s141 = scalar_lea.hbm %s1, %s140
      %s142 = scalar_lea.vmem [#allocation2], 1
      %s143 = scalar_lea.sflag [#allocation3], 1
      // Predicated region
      $region33: #{tpu_custom_call.1} parent=23 // pred_check
        _
      $region34: #{tpu_custom_call.1} parent=23 // pred_check_branch
        %145 = sbr.rel target = $region36
      $region35: #{tpu_custom_call.1} parent=23 // pred_region
        %146 = sst [smem:[#allocation9]] [#allocation14]
        %147 = sst [smem:[#allocation10]] [#allocation13]
      $region36: #{tpu_custom_call.1} parent=23 // pred_fallthru
        _
      %149 = shalt.err (0)
      %s151 = sshll.u32 %s142, 4
      %s152 = int_to_ptr.vmem [resolvable:$true] %s151
      %154 = dma.hbm_to_vmem [thread:$0]  %s141, 16, %s152, %s143
      %s155 = sadd.s32 %s138, 1
      %s156 = sld [smem:[#allocation5 + %s155]]
      %s157 = smul.addr %s156, 16
      %s158 = scalar_lea.hbm %s1, %s157
      %s159 = scalar_lea.vmem [#allocation2], 9
      %s160 = scalar_lea.sflag [#allocation3], 9
      // Predicated region
      $region37: #{tpu_custom_call.1} parent=23 // pred_check
        _
      $region38: #{tpu_custom_call.1} parent=23 // pred_check_branch
        %162 = sbr.rel target = $region40
      $region39: #{tpu_custom_call.1} parent=23 // pred_region
        %163 = sst [smem:[#allocation9]] [#allocation16]
        %164 = sst [smem:[#allocation10]] [#allocation15]
      $region40: #{tpu_custom_call.1} parent=23 // pred_fallthru
        _
      %166 = shalt.err (0)
      %s168 = sshll.u32 %s159, 4
      %s169 = int_to_ptr.vmem [resolvable:$true] %s168
      %171 = dma.hbm_to_vmem [thread:$0]  %s158, 16, %s169, %s160
      %s172 = sadd.s32 %s104, 2
      %s173 = smul.u32 %s172, 128
      %s174 = sld [smem:[#allocation5 + %s173]]
      %s175 = smul.addr %s174, 16
      %s176 = scalar_lea.hbm %s1, %s175
      %s177 = scalar_lea.vmem [#allocation2], 2
      %s178 = scalar_lea.sflag [#allocation3], 2
      // Predicated region
      $region41: #{tpu_custom_call.1} parent=23 // pred_check
        _
      $region42: #{tpu_custom_call.1} parent=23 // pred_check_branch
        %180 = sbr.rel target = $region44
      $region43: #{tpu_custom_call.1} parent=23 // pred_region
        %181 = sst [smem:[#allocation9]] [#allocation18]
        %182 = sst [smem:[#allocation10]] [#allocation17]
      $region44: #{tpu_custom_call.1} parent=23 // pred_fallthru
        _
      %184 = shalt.err (0)
      %s186 = sshll.u32 %s177, 4
      %s187 = int_to_ptr.vmem [resolvable:$true] %s186
      %189 = dma.hbm_to_vmem [thread:$0]  %s176, 16, %s187, %s178
      %s190 = sadd.s32 %s173, 1
      %s191 = sld [smem:[#allocation5 + %s190]]
      %s192 = smul.addr %s191, 16
      %s193 = scalar_lea.hbm %s1, %s192
      %s194 = scalar_lea.vmem [#allocation2], 10
      %s195 = scalar_lea.sflag [#allocation3], 10
      // Predicated region
      $region45: #{tpu_custom_call.1} parent=23 // pred_check
        _
      $region46: #{tpu_custom_call.1} parent=23 // pred_check_branch
        %197 = sbr.rel target = $region48
      $region47: #{tpu_custom_call.1} parent=23 // pred_region
        %198 = sst [smem:[#allocation9]] [#allocation20]
        %199 = sst [smem:[#allocation10]] [#allocation19]
      $region48: #{tpu_custom_call.1} parent=23 // pred_fallthru
        _
      %201 = shalt.err (0)
      %s203 = sshll.u32 %s194, 4
      %s204 = int_to_ptr.vmem [resolvable:$true] %s203
      %206 = dma.hbm_to_vmem [thread:$0]  %s193, 16, %s204, %s195
      %s207 = sadd.s32 %s104, 3
      %s208 = smul.u32 %s207, 128
      %s209 = sld [smem:[#allocation5 + %s208]]
      %s210 = smul.addr %s209, 16
      %s211 = scalar_lea.hbm %s1, %s210
      %s212 = scalar_lea.vmem [#allocation2], 3
      %s213 = scalar_lea.sflag [#allocation3], 3
      // Predicated region
      $region49: #{tpu_custom_call.1} parent=23 // pred_check
        _
      $region50: #{tpu_custom_call.1} parent=23 // pred_check_branch
        %215 = sbr.rel target = $region52
      $region51: #{tpu_custom_call.1} parent=23 // pred_region
        %216 = sst [smem:[#allocation9]] [#allocation22]
        %217 = sst [smem:[#allocation10]] [#allocation21]
      $region52: #{tpu_custom_call.1} parent=23 // pred_fallthru
        _
      %219 = shalt.err (0)
      %s221 = sshll.u32 %s212, 4
      %s222 = int_to_ptr.vmem [resolvable:$true] %s221
      %224 = dma.hbm_to_vmem [thread:$0]  %s211, 16, %s222, %s213
      %s225 = sadd.s32 %s208, 1
      %s226 = sld [smem:[#allocation5 + %s225]]
      %s227 = smul.addr %s226, 16
      %s228 = scalar_lea.hbm %s1, %s227
      %s229 = scalar_lea.vmem [#allocation2], 11
      %s230 = scalar_lea.sflag [#allocation3], 11
      // Predicated region
      $region53: #{tpu_custom_call.1} parent=23 // pred_check
        _
      $region54: #{tpu_custom_call.1} parent=23 // pred_check_branch
        %232 = sbr.rel target = $region56
      $region55: #{tpu_custom_call.1} parent=23 // pred_region
        %233 = sst [smem:[#allocation9]] [#allocation24]
        %234 = sst [smem:[#allocation10]] [#allocation23]
      $region56: #{tpu_custom_call.1} parent=23 // pred_fallthru
        _
      %236 = shalt.err (0)
      %s238 = sshll.u32 %s229, 4
      %s239 = int_to_ptr.vmem [resolvable:$true] %s238
      %241 = dma.hbm_to_vmem [thread:$0]  %s228, 16, %s239, %s230
      %s242 = sadd.s32 %s104, 4
      %s243 = smul.u32 %s242, 128
      %s244 = sld [smem:[#allocation5 + %s243]]
      %s245 = smul.addr %s244, 16
      %s246 = scalar_lea.hbm %s1, %s245
      %s247 = scalar_lea.vmem [#allocation2], 4
      %s248 = scalar_lea.sflag [#allocation3], 4
      // Predicated region
      $region57: #{tpu_custom_call.1} parent=23 // pred_check
        _
      $region58: #{tpu_custom_call.1} parent=23 // pred_check_branch
        %250 = sbr.rel target = $region60
      $region59: #{tpu_custom_call.1} parent=23 // pred_region
        %251 = sst [smem:[#allocation9]] [#allocation26]
        %252 = sst [smem:[#allocation10]] [#allocation25]
      $region60: #{tpu_custom_call.1} parent=23 // pred_fallthru
        _
      %254 = shalt.err (0)
      %s256 = sshll.u32 %s247, 4
      %s257 = int_to_ptr.vmem [resolvable:$true] %s256
      %259 = dma.hbm_to_vmem [thread:$0]  %s246, 16, %s257, %s248
      %s260 = sadd.s32 %s243, 1
      %s261 = sld [smem:[#allocation5 + %s260]]
      %s262 = smul.addr %s261, 16
      %s263 = scalar_lea.hbm %s1, %s262
      %s264 = scalar_lea.vmem [#allocation2], 12
      %s265 = scalar_lea.sflag [#allocation3], 12
      // Predicated region
      $region61: #{tpu_custom_call.1} parent=23 // pred_check
        _
      $region62: #{tpu_custom_call.1} parent=23 // pred_check_branch
        %267 = sbr.rel target = $region64
      $region63: #{tpu_custom_call.1} parent=23 // pred_region
        %268 = sst [smem:[#allocation9]] [#allocation28]
        %269 = sst [smem:[#allocation10]] [#allocation27]
      $region64: #{tpu_custom_call.1} parent=23 // pred_fallthru
        _
      %271 = shalt.err (0)
      %s273 = sshll.u32 %s264, 4
      %s274 = int_to_ptr.vmem [resolvable:$true] %s273
      %276 = dma.hbm_to_vmem [thread:$0]  %s263, 16, %s274, %s265
      %s277 = sadd.s32 %s104, 5
      %s278 = smul.u32 %s277, 128
      %s279 = sld [smem:[#allocation5 + %s278]]
      %s280 = smul.addr %s279, 16
      %s281 = scalar_lea.hbm %s1, %s280
      %s282 = scalar_lea.vmem [#allocation2], 5
      %s283 = scalar_lea.sflag [#allocation3], 5
      // Predicated region
      $region65: #{tpu_custom_call.1} parent=23 // pred_check
        _
      $region66: #{tpu_custom_call.1} parent=23 // pred_check_branch
        %285 = sbr.rel target = $region68
      $region67: #{tpu_custom_call.1} parent=23 // pred_region
        %286 = sst [smem:[#allocation9]] [#allocation30]
        %287 = sst [smem:[#allocation10]] [#allocation29]
      $region68: #{tpu_custom_call.1} parent=23 // pred_fallthru
        _
      %289 = shalt.err (0)
      %s291 = sshll.u32 %s282, 4
      %s292 = int_to_ptr.vmem [resolvable:$true] %s291
      %294 = dma.hbm_to_vmem [thread:$0]  %s281, 16, %s292, %s283
      %s295 = sadd.s32 %s278, 1
      %s296 = sld [smem:[#allocation5 + %s295]]
      %s297 = smul.addr %s296, 16
      %s298 = scalar_lea.hbm %s1, %s297
      %s299 = scalar_lea.vmem [#allocation2], 13
      %s300 = scalar_lea.sflag [#allocation3], 13
      // Predicated region
      $region69: #{tpu_custom_call.1} parent=23 // pred_check
        _
      $region70: #{tpu_custom_call.1} parent=23 // pred_check_branch
        %302 = sbr.rel target = $region72
      $region71: #{tpu_custom_call.1} parent=23 // pred_region
        %303 = sst [smem:[#allocation9]] [#allocation32]
        %304 = sst [smem:[#allocation10]] [#allocation31]
      $region72: #{tpu_custom_call.1} parent=23 // pred_fallthru
        _
      %306 = shalt.err (0)
      %s308 = sshll.u32 %s299, 4
      %s309 = int_to_ptr.vmem [resolvable:$true] %s308
      %311 = dma.hbm_to_vmem [thread:$0]  %s298, 16, %s309, %s300
      %s312 = sadd.s32 %s104, 6
      %s313 = smul.u32 %s312, 128
      %s314 = sld [smem:[#allocation5 + %s313]]
      %s315 = smul.addr %s314, 16
      %s316 = scalar_lea.hbm %s1, %s315
      %s317 = scalar_lea.vmem [#allocation2], 6
      %s318 = scalar_lea.sflag [#allocation3], 6
      // Predicated region
      $region73: #{tpu_custom_call.1} parent=23 // pred_check
        _
      $region74: #{tpu_custom_call.1} parent=23 // pred_check_branch
        %320 = sbr.rel target = $region76
      $region75: #{tpu_custom_call.1} parent=23 // pred_region
        %321 = sst [smem:[#allocation9]] [#allocation34]
        %322 = sst [smem:[#allocation10]] [#allocation33]
      $region76: #{tpu_custom_call.1} parent=23 // pred_fallthru
        _
      %324 = shalt.err (0)
      %s326 = sshll.u32 %s317, 4
      %s327 = int_to_ptr.vmem [resolvable:$true] %s326
      %329 = dma.hbm_to_vmem [thread:$0]  %s316, 16, %s327, %s318
      %s330 = sadd.s32 %s313, 1
      %s331 = sld [smem:[#allocation5 + %s330]]
      %s332 = smul.addr %s331, 16
      %s333 = scalar_lea.hbm %s1, %s332
      %s334 = scalar_lea.vmem [#allocation2], 14
      %s335 = scalar_lea.sflag [#allocation3], 14
      // Predicated region
      $region77: #{tpu_custom_call.1} parent=23 // pred_check
        _
      $region78: #{tpu_custom_call.1} parent=23 // pred_check_branch
        %337 = sbr.rel target = $region80
      $region79: #{tpu_custom_call.1} parent=23 // pred_region
        %338 = sst [smem:[#allocation9]] [#allocation36]
        %339 = sst [smem:[#allocation10]] [#allocation35]
      $region80: #{tpu_custom_call.1} parent=23 // pred_fallthru
        _
      %341 = shalt.err (0)
      %s343 = sshll.u32 %s334, 4
      %s344 = int_to_ptr.vmem [resolvable:$true] %s343
      %346 = dma.hbm_to_vmem [thread:$0]  %s333, 16, %s344, %s335
      %s347 = sadd.s32 %s104, 7
      %s348 = smul.u32 %s347, 128
      %s349 = sld [smem:[#allocation5 + %s348]]
      %s350 = smul.addr %s349, 16
      %s351 = scalar_lea.hbm %s1, %s350
      %s352 = scalar_lea.vmem [#allocation2], 7
      %s353 = scalar_lea.sflag [#allocation3], 7
      // Predicated region
      $region81: #{tpu_custom_call.1} parent=23 // pred_check
        _
      $region82: #{tpu_custom_call.1} parent=23 // pred_check_branch
        %355 = sbr.rel target = $region84
      $region83: #{tpu_custom_call.1} parent=23 // pred_region
        %356 = sst [smem:[#allocation9]] [#allocation38]
        %357 = sst [smem:[#allocation10]] [#allocation37]
      $region84: #{tpu_custom_call.1} parent=23 // pred_fallthru
        _
      %359 = shalt.err (0)
      %s361 = sshll.u32 %s352, 4
      %s362 = int_to_ptr.vmem [resolvable:$true] %s361
      %364 = dma.hbm_to_vmem [thread:$0]  %s351, 16, %s362, %s353
      %s365 = sadd.s32 %s348, 1
      %s366 = sld [smem:[#allocation5 + %s365]]
      %s367 = smul.addr %s366, 16
      %s368 = scalar_lea.hbm %s1, %s367
      %s369 = scalar_lea.vmem [#allocation2], 15
      %s370 = scalar_lea.sflag [#allocation3], 15
      // Predicated region
      $region85: #{tpu_custom_call.1} parent=23 // pred_check
        _
      $region86: #{tpu_custom_call.1} parent=23 // pred_check_branch
        %372 = sbr.rel target = $region88
      $region87: #{tpu_custom_call.1} parent=23 // pred_region
        %373 = sst [smem:[#allocation9]] [#allocation40]
        %374 = sst [smem:[#allocation10]] [#allocation39]
      $region88: #{tpu_custom_call.1} parent=23 // pred_fallthru
        _
      %376 = shalt.err (0)
      %s378 = sshll.u32 %s369, 4
      %s379 = int_to_ptr.vmem [resolvable:$true] %s378
      %381 = dma.hbm_to_vmem [thread:$0]  %s368, 16, %s379, %s370
      %s382 = smul.u32 1, 1
      %s383 = sshll.u32 %s382, 4
      %384 = dma.done [#allocation3], %s383
      %s385 = sshll.u32 %s382, 4
      %386 = dma.done %s125, %s385
      %s387 = sshll.u32 %s382, 4
      %388 = dma.done %s143, %s387
      %s389 = sshll.u32 %s382, 4
      %390 = dma.done %s160, %s389
      %s391 = sshll.u32 %s382, 4
      %392 = dma.done %s178, %s391
      %s393 = sshll.u32 %s382, 4
      %394 = dma.done %s195, %s393
      %s395 = sshll.u32 %s382, 4
      %396 = dma.done %s213, %s395
      %s397 = sshll.u32 %s382, 4
      %398 = dma.done %s230, %s397
      %s399 = sshll.u32 %s382, 4
      %400 = dma.done %s248, %s399
      %s401 = sshll.u32 %s382, 4
      %402 = dma.done %s265, %s401
      %s403 = sshll.u32 %s382, 4
      %404 = dma.done %s283, %s403
      %s405 = sshll.u32 %s382, 4
      %406 = dma.done %s300, %s405
      %s407 = sshll.u32 %s382, 4
      %408 = dma.done %s318, %s407
      %s409 = sshll.u32 %s382, 4
      %410 = dma.done %s335, %s409
      %s411 = sshll.u32 %s382, 4
      %412 = dma.done %s353, %s411
      %s413 = sshll.u32 %s382, 4
      %414 = dma.done %s370, %s413
      %v415 = vld [vmem:[#allocation2] sm:$0xff]
      %v416 = vmul.f32 %v415, %v415
      %v417 = vld [vmem:[%s124] sm:$0xff]
      %v418 = vadd.f32 %v415, %v417
      %v419 = vmul.f32 %v417, %v417
      %v420 = vadd.f32 %v416, %v419
      %v421 = vlaneseq
      %v422 = vand.u32 %v421, 127
      %vm423 = vcmp.lt.s32.totalorder %v422, 16
      %v424 = vmul.f32 %v418, %v418
      %v425 = vsub.f32 %v424, %v420
      %v426 = vsel %vm423, %v425, 0.0
      %vm427 = vcmp.eq.s32.totalorder %v422, 16
      %v428 = vsel %vm427, %v418, 0.0
      %v429 = vmul.f32 %v426, 0.5
      %v430 = vadd.f32 %v429, %v428
      %431 = vadd.xlane.f32.xlu0 %v430
      %v432 = vpop.xlane.xlu0 %431
      %s433 = sld [smem:[#allocation6]]
      %v434 = vstv %s433
      %v435 = vadd.f32 %v432, %v434
      %vm436 = vcmask 7168
      %437 = vst.msk [vmem:[%s103] sm:$0xff] %vm436, %v435
      %p438 = scmp.lt.s32.totalorder %s21, 1
      %s439 = scalar_select %p438, %s21, 1
      %s440 = smul.addr %s439, 8
      %s441 = scalar_lea.vmem %s3, %s440
      // Predicated region
      $region89: #{tpu_custom_call.1} parent=23 // pred_check
        %p442 = pneg %p60
      $region90: #{tpu_custom_call.1} parent=23 // pred_check_branch
        %444 = sbr.rel (%p442) target = $region92
      $region91: #{tpu_custom_call.1} parent=23 // pred_region
        _
      $region92: #{tpu_custom_call.1} parent=23 // pred_fallthru
        _
    $region24: #{tpu_custom_call.1} parent=5 // pred_fallthru
      _
    %p445 = scmp.le.s32.totalorder 2, %s16
    // Predicated region
    $region93: #{tpu_custom_call.1} parent=5 // pred_check
      %p446 = pneg %p445
    $region94: #{tpu_custom_call.1} parent=5 // pred_check_branch
      %448 = sbr.rel (%p446) target = $region96
    $region95: #{tpu_custom_call.1} parent=5 // pred_region
      %s449 = ssub.s32 %s16, 2
      // Predicated region
      $region97: #{tpu_custom_call.1} parent=95 // pred_check
        %p450 = pneg %p66
      $region98: #{tpu_custom_call.1} parent=95 // pred_check_branch
        %452 = sbr.rel (%p450) target = $region100
      $region99: #{tpu_custom_call.1} parent=95 // pred_region
        %p453 = scmp.lt.s32.totalorder %s22, 1
        %s454 = scalar_select %p453, %s22, 1
        %s455 = smul.addr %s454, 8
        %s456 = scalar_lea.vmem %s3, %s455
      $region100: #{tpu_custom_call.1} parent=95 // pred_fallthru
        _
    $region96: #{tpu_custom_call.1} parent=5 // pred_fallthru
      _
  $region6: #{tpu_custom_call.1} parent=0 // loop_footer
    %s20 = sadd.s32 1, %s16
  $region7: #{tpu_custom_call.1} parent=0 // loop_footer_branch
    %15 = sbr.rel target = $region3
  $region8: #{tpu_custom_call.1} parent=0 // loop_exit
    _
  %457 = vsyncmov [#allocation3]
  %s458 = vpop.sfrf %457
  %p459 = scmp.eq.s32.totalorder %s458, 0
  %p460 = pneg %p459
  %462 = shalt.err (%p460)
  %s463 = scalar_lea.sflag [#allocation3], 1
  %464 = vsyncmov %s463
  %s465 = vpop.sfrf %464
  %p466 = scmp.eq.s32.totalorder %s465, 0
  %p467 = pneg %p466
  %469 = shalt.err (%p467)
  %s470 = scalar_lea.sflag [#allocation3], 2
  %471 = vsyncmov %s470
  %s472 = vpop.sfrf %471
  %p473 = scmp.eq.s32.totalorder %s472, 0
  %p474 = pneg %p473
  %476 = shalt.err (%p474)
  %s477 = scalar_lea.sflag [#allocation3], 3
  %478 = vsyncmov %s477
  %s479 = vpop.sfrf %478
  %p480 = scmp.eq.s32.totalorder %s479, 0
  %p481 = pneg %p480
  %483 = shalt.err (%p481)
  %s484 = scalar_lea.sflag [#allocation3], 4
  %485 = vsyncmov %s484
  %s486 = vpop.sfrf %485
  %p487 = scmp.eq.s32.totalorder %s486, 0
  %p488 = pneg %p487
  %490 = shalt.err (%p488)
  %s491 = scalar_lea.sflag [#allocation3], 5
  %492 = vsyncmov %s491
  %s493 = vpop.sfrf %492
  %p494 = scmp.eq.s32.totalorder %s493, 0
  %p495 = pneg %p494
  %497 = shalt.err (%p495)
  %s498 = scalar_lea.sflag [#allocation3], 6
  %499 = vsyncmov %s498
  %s500 = vpop.sfrf %499
  %p501 = scmp.eq.s32.totalorder %s500, 0
  %p502 = pneg %p501
  %504 = shalt.err (%p502)
  %s505 = scalar_lea.sflag [#allocation3], 7
  %506 = vsyncmov %s505
  %s507 = vpop.sfrf %506
  %p508 = scmp.eq.s32.totalorder %s507, 0
  %p509 = pneg %p508
  %511 = shalt.err (%p509)
  %s512 = scalar_lea.sflag [#allocation3], 8
  %513 = vsyncmov %s512
  %s514 = vpop.sfrf %513
  %p515 = scmp.eq.s32.totalorder %s514, 0
  %p516 = pneg %p515
  %518 = shalt.err (%p516)
  %s519 = scalar_lea.sflag [#allocation3], 9
  %520 = vsyncmov %s519
  %s521 = vpop.sfrf %520
  %p522 = scmp.eq.s32.totalorder %s521, 0
  %p523 = pneg %p522
  %525 = shalt.err (%p523)
  %s526 = scalar_lea.sflag [#allocation3], 10
  %527 = vsyncmov %s526
  %s528 = vpop.sfrf %527
  %p529 = scmp.eq.s32.totalorder %s528, 0
  %p530 = pneg %p529
  %532 = shalt.err (%p530)
  %s533 = scalar_lea.sflag [#allocation3], 11
  %534 = vsyncmov %s533
  %s535 = vpop.sfrf %534
  %p536 = scmp.eq.s32.totalorder %s535, 0
  %p537 = pneg %p536
  %539 = shalt.err (%p537)
  %s540 = scalar_lea.sflag [#allocation3], 12
  %541 = vsyncmov %s540
  %s542 = vpop.sfrf %541
  %p543 = scmp.eq.s32.totalorder %s542, 0
  %p544 = pneg %p543
  %546 = shalt.err (%p544)
  %s547 = scalar_lea.sflag [#allocation3], 13
  %548 = vsyncmov %s547
  %s549 = vpop.sfrf %548
  %p550 = scmp.eq.s32.totalorder %s549, 0
  %p551 = pneg %p550
  %553 = shalt.err (%p551)
  %s554 = scalar_lea.sflag [#allocation3], 14
  %555 = vsyncmov %s554
  %s556 = vpop.sfrf %555
  %p557 = scmp.eq.s32.totalorder %s556, 0
  %p558 = pneg %p557
  %560 = shalt.err (%p558)
  %s561 = scalar_lea.sflag [#allocation3], 15
  %562 = vsyncmov %s561
  %s563 = vpop.sfrf %562
  %p564 = scmp.eq.s32.totalorder %s563, 0
  %p565 = pneg %p564
  %567 = shalt.err (%p565)

</llo_original>
